<compile_context>
chip_gen: v7x
topology: tpu7x:2x2x1
jax: 0.10.0
libtpu: 0.0.40
codegen_flags: <defaults>
</compile_context>

<pallas_src>
import functools

import jax
import jax.numpy as jnp
import numpy as np
from jax import lax
from jax.experimental import pallas as pl
from jax.experimental.pallas import tpu as pltpu


# ---------------------------------------------------------------------------
# Kernels
# ---------------------------------------------------------------------------
def _upsample_kernel(x_ref, o_ref):
    """Nearest 2x upsample of a row tile.

    x_ref: (TR, W, C)          input rows
    o_ref: (TR, 2, W, 2, C)    output; wrapper reshapes to (2*TR, 2W, C) for free
    """
    x = x_ref[...]
    o_ref[...] = jnp.broadcast_to(x[:, None, :, None, :], o_ref.shape).astype(o_ref.dtype)


def _upsample_conv_kernel(x_ref, w_ref, b_ref, o_ref):
    """Fused nearest 2x upsample + 3x3 'same' conv via sub-pixel phase decomposition.

    x_ref: (TR+2, W+2, C)  zero-padded input rows for this tile (1-row halo each side)
    w_ref: (4, 4*C, C)     phase-decomposed weights, phase p = 2*row_phase + col_phase,
                           K axis ordered (s, t, c_in) with s,t in {0,1}
    b_ref: (1, C)          bias
    o_ref: (4, TR, W, C)   per-phase outputs (wrapper interleaves phases afterwards)
    """
    trp2, wp, c = x_ref.shape
    tr, w = trp2 - 2, wp - 2

    x = x_ref[...]
    bias = b_ref[...].astype(jnp.float32)                       # (1, C)

    for p in range(4):                                          # 4 output phases (static unroll)
        pa, pb = divmod(p, 2)                                   # row phase, col phase
        # 2x2 taps of the ORIGINAL (padded) image feeding this phase.
        taps = [x[pa + s:pa + s + tr, pb + t:pb + t + w, :]
                for s in range(2) for t in range(2)]
        patch = jnp.concatenate(taps, axis=-1).reshape(tr * w, 4 * c)   # (TR*W, 4C)
        acc = jnp.dot(patch, w_ref[p], preferred_element_type=jnp.float32)
        acc = acc + bias
        o_ref[p] = acc.reshape(tr, w, c).astype(o_ref.dtype)


# ---------------------------------------------------------------------------
# Wrapper helpers
# ---------------------------------------------------------------------------
def _phase_weights(w_hwio):
    """Regroup (3,3,Cin,Cout) HWIO weights into 4 phase weights of shape (4*Cin, Cout).

    For output pixel (2i+a, 2j+b), kernel tap (ky, kx) of the upsampled image lands
    on original pixel (i + (a+ky-1)//2, j + (b+kx-1)//2); taps landing on the same
    original pixel are pre-summed.  Window-local tap index: s=(ky+1-a)//2, t=(kx+1-b)//2.
    """
    _, _, cin, cout = w_hwio.shape
    wph = jnp.zeros((2, 2, 2, 2, cin, cout), dtype=w_hwio.dtype)
    for a in range(2):
        for b in range(2):
            for ky in range(3):
                for kx in range(3):
                    s = (ky + 1 - a) // 2
                    t = (kx + 1 - b) // 2
                    wph = wph.at[a, b, s, t].add(w_hwio[ky, kx])
    return wph.reshape(4, 4 * cin, cout)        # p = 2a+b ; K ordered (s, t, c_in)


def _row_tile(h, target=8):
    """Largest divisor of h that is <= target (kept small here; raise for big VMEM)."""
    t = min(h, target)
    while h % t:
        t -= 1
    return t


# ---------------------------------------------------------------------------
# Wrapper (NCHW in / NCHW out, like the PyTorch module)
# ---------------------------------------------------------------------------
@functools.partial(jax.jit, static_argnames=("with_conv",))
def upsample_forward(x_nchw, weight_hwio, bias, with_conv=True):
    x = jnp.transpose(x_nchw, (0, 2, 3, 1))                     # NCHW -> NHWC
    B, H, W, C = x.shape
    TR = _row_tile(H)
    nt = H // TR

    cparams = pltpu.CompilerParams(
        dimension_semantics=("parallel", "parallel"),           # batch x row tiles
        vmem_limit_bytes=64 * 1024 * 1024,
    )

    if with_conv:
        # One-time weight regrouping + cast; constant index_map keeps it VMEM-resident.
        wph = _phase_weights(weight_hwio).astype(x.dtype)       # (4, 4C, C)
        b2 = bias.reshape(1, C).astype(x.dtype)

        # Zero-pad once (SAME semantics), then build overlapping row tiles with a
        # 2-row halo wrapper-side so the kernel BlockSpec stays plain Blocked.
        xp = jnp.pad(x, ((0, 0), (1, 1), (1, 1), (0, 0)))       # (B, H+2, W+2, C)
        x_tiles = jnp.stack(
            [xp[:, t * TR: t * TR + TR + 2] for t in range(nt)], axis=1
        )                                                       # (B, nt, TR+2, W+2, C)

        out_ph = pl.pallas_call(
            _upsample_conv_kernel,
            out_shape=jax.ShapeDtypeStruct((B, 4, H, W, C), x.dtype),
            grid=(B, nt),
            in_specs=[
                pl.BlockSpec((None, None, TR + 2, W + 2, C),
                             lambda b, t: (b, t, 0, 0, 0)),
                pl.BlockSpec((4, 4 * C, C), lambda b, t: (0, 0, 0)),
                pl.BlockSpec((1, C), lambda b, t: (0, 0)),
            ],
            out_specs=pl.BlockSpec((None, 4, TR, W, C),
                                   lambda b, t: (b, 0, t, 0, 0)),
            compiler_params=cparams,
        )(x_tiles, wph, b2)

        # Interleave phases: (B,4,H,W,C) -> (B,2H,2W,C)  (cheap layout plumbing in XLA).
        out = out_ph.reshape(B, 2, 2, H, W, C)
        out = jnp.transpose(out, (0, 3, 1, 4, 2, 5))            # (B, H, 2, W, 2, C)
        out_nhwc = out.reshape(B, 2 * H, 2 * W, C)
    else:
        out6 = pl.pallas_call(
            _upsample_kernel,
            out_shape=jax.ShapeDtypeStruct((B, H, 2, W, 2, C), x.dtype),
            grid=(B, nt),
            in_specs=[pl.BlockSpec((None, TR, W, C), lambda b, t: (b, t, 0, 0))],
            out_specs=pl.BlockSpec((None, TR, 2, W, 2, C),
                                   lambda b, t: (b, t, 0, 0, 0, 0)),
            compiler_params=cparams,
        )(x)
        # (B,H,2,W,2,C) -> (B,2H,2W,C) is a contiguous (free) regrouping.
        out_nhwc = out6.reshape(B, 2 * H, 2 * W, C)

    return jnp.transpose(out_nhwc, (0, 3, 1, 2))                # NHWC -> NCHW


# ---------------------------------------------------------------------------
# Pure-JAX reference (for correctness check)
# ---------------------------------------------------------------------------
def upsample_reference(x_nchw, weight_hwio, bias, with_conv=True):
    x = jnp.transpose(x_nchw, (0, 2, 3, 1))
    up = jnp.repeat(jnp.repeat(x, 2, axis=1), 2, axis=2)
    if with_conv:
        up = lax.conv_general_dilated(
            up, weight_hwio, window_strides=(1, 1), padding="SAME",
            dimension_numbers=("NHWC", "HWIO", "NHWC"),
            precision=lax.Precision.HIGHEST) + bias
    return jnp.transpose(up, (0, 3, 1, 2))


# ---------------------------------------------------------------------------
if __name__ == "__main__":
    key = jax.random.PRNGKey(0)
    kx, kw, kb = jax.random.split(key, 3)

    B, C, H, W = 2, 4, 16, 16
    x = jax.random.normal(kx, (B, C, H, W), dtype=jnp.float32)

    # Synthetic parameters for Conv2d(C, C, kernel_size=3, padding=1), stored HWIO.
    weight = jax.random.normal(kw, (3, 3, C, C), dtype=jnp.float32) * 0.1
    bias = jax.random.normal(kb, (C,), dtype=jnp.float32) * 0.1

    ok = True
    for with_conv in (True, False):
        out = jax.block_until_ready(upsample_forward(x, weight, bias, with_conv=with_conv))
        ref = upsample_reference(x, weight, bias, with_conv=with_conv)
        assert out.shape == (B, C, 2 * H, 2 * W), out.shape
        a_out, a_ref = np.asarray(out), np.asarray(ref)
        # f32 path typically matches to ~1e-5; tolerance leaves headroom for MXU
        # reduced-precision pass modes on some platforms.
        if not np.allclose(a_out, a_ref, atol=1e-3, rtol=1e-3):
            ok = False
            print(f"mismatch (with_conv={with_conv}): "
                  f"max abs err {np.abs(a_out - a_ref).max()}")

    if ok:
        print("KERNEL_OK")
</pallas_src>

<mosaic_0001>
module attributes {stable_mosaic.version = 11 : i64} {
  func.func @_upsample_conv_kernel(%arg0: i32, %arg1: i32, %arg2: memref<1x1x10x18x4xf32, #tpu.memory_space<vmem>>, %arg3: memref<4x16x4xf32, #tpu.memory_space<vmem>>, %arg4: memref<1x4xf32, #tpu.memory_space<vmem>>, %arg5: memref<1x4x8x16x4xf32, #tpu.memory_space<vmem>>) attributes {dimension_semantics = [#tpu.dimension_semantics<parallel>, #tpu.dimension_semantics<parallel>], iteration_bounds = array<i64: 2, 2>, scalar_prefetch = 0 : i64, scratch_operands = 0 : i64, tpu.core_type = #tpu.core_type<tc>, window_params = [{transform_indices = @transform_0, window_bounds = array<i64: 1, 1, 10, 18, 4>}, {pipeline_mode = #tpu.pipeline_mode<synchronous>, transform_indices = @transform_1, window_bounds = array<i64: 4, 16, 4>}, {pipeline_mode = #tpu.pipeline_mode<synchronous>, transform_indices = @transform_2, window_bounds = array<i64: 1, 4>}, {transform_indices = @transform_3, window_bounds = array<i64: 1, 4, 8, 16, 4>}]} {
    %c0 = arith.constant 0 : index
    %c0_0 = arith.constant 0 : index
    %c0_1 = arith.constant 0 : index
    %c0_2 = arith.constant 0 : index
    %c0_3 = arith.constant 0 : index
    %0 = vector.load %arg2[%c0, %c0_0, %c0_1, %c0_2, %c0_3] : memref<1x1x10x18x4xf32, #tpu.memory_space<vmem>>, vector<1x1x10x18x4xf32>
    %1 = vector.shape_cast %0 : vector<1x1x10x18x4xf32> to vector<10x18x4xf32>
    %c0_4 = arith.constant 0 : index
    %c0_5 = arith.constant 0 : index
    %2 = vector.load %arg4[%c0_4, %c0_5] : memref<1x4xf32, #tpu.memory_space<vmem>>, vector<1x4xf32>
    %3 = vector.extract_strided_slice %1 {offsets = [0, 0, 0], sizes = [8, 16, 4], strides = [1, 1, 1]} : vector<10x18x4xf32> to vector<8x16x4xf32>
    %4 = vector.extract_strided_slice %1 {offsets = [0, 1, 0], sizes = [8, 16, 4], strides = [1, 1, 1]} : vector<10x18x4xf32> to vector<8x16x4xf32>
    %5 = vector.extract_strided_slice %1 {offsets = [1, 0, 0], sizes = [8, 16, 4], strides = [1, 1, 1]} : vector<10x18x4xf32> to vector<8x16x4xf32>
    %6 = vector.extract_strided_slice %1 {offsets = [1, 1, 0], sizes = [8, 16, 4], strides = [1, 1, 1]} : vector<10x18x4xf32> to vector<8x16x4xf32>
    %7 = tpu.concatenate %3, %4, %5, %6 in 2 : vector<8x16x4xf32>, vector<8x16x4xf32>, vector<8x16x4xf32>, vector<8x16x4xf32> -> vector<8x16x16xf32>
    %8 = vector.shape_cast %7 : vector<8x16x16xf32> to vector<128x16xf32>
    %c0_6 = arith.constant 0 : index
    %c0_7 = arith.constant 0 : index
    %c0_8 = arith.constant 0 : index
    %9 = vector.load %arg3[%c0_6, %c0_7, %c0_8] : memref<4x16x4xf32, #tpu.memory_space<vmem>>, vector<1x16x4xf32>
    %10 = vector.shape_cast %9 : vector<1x16x4xf32> to vector<16x4xf32>
    %cst = arith.constant dense<0.000000e+00> : vector<128x4xf32>
    %11 = tpu.matmul %8, %10, %cst {dimension_numbers = #tpu.dot_dimension_numbers<[1], [0], [0], [1], [0, 0, 1, 1], [], []>} : vector<128x16xf32>, vector<16x4xf32>, vector<128x4xf32> -> vector<128x4xf32>
    %12 = vector.broadcast %2 : vector<1x4xf32> to vector<128x4xf32>
    %13 = arith.addf %11, %12 : vector<128x4xf32>
    %14 = vector.shape_cast %13 : vector<128x4xf32> to vector<8x16x4xf32>
    %c0_9 = arith.constant 0 : index
    %c0_10 = arith.constant 0 : index
    %c0_11 = arith.constant 0 : index
    %c0_12 = arith.constant 0 : index
    %c0_13 = arith.constant 0 : index
    %15 = vector.load %arg5[%c0_9, %c0_10, %c0_11, %c0_12, %c0_13] : memref<1x4x8x16x4xf32, #tpu.memory_space<vmem>>, vector<1x1x8x16x4xf32>
    %16 = vector.shape_cast %15 : vector<1x1x8x16x4xf32> to vector<8x16x4xf32>
    %17 = vector.shape_cast %14 : vector<8x16x4xf32> to vector<1x1x8x16x4xf32>
    tpu.vector_store %arg5[%c0_9, %c0_10, %c0_11, %c0_12, %c0_13], %17 {strides = array<i32>} : memref<1x4x8x16x4xf32, #tpu.memory_space<vmem>>, vector<1x1x8x16x4xf32>,
    %18 = vector.extract_strided_slice %1 {offsets = [0, 1, 0], sizes = [8, 16, 4], strides = [1, 1, 1]} : vector<10x18x4xf32> to vector<8x16x4xf32>
    %19 = vector.extract_strided_slice %1 {offsets = [0, 2, 0], sizes = [8, 16, 4], strides = [1, 1, 1]} : vector<10x18x4xf32> to vector<8x16x4xf32>
    %20 = vector.extract_strided_slice %1 {offsets = [1, 1, 0], sizes = [8, 16, 4], strides = [1, 1, 1]} : vector<10x18x4xf32> to vector<8x16x4xf32>
    %21 = vector.extract_strided_slice %1 {offsets = [1, 2, 0], sizes = [8, 16, 4], strides = [1, 1, 1]} : vector<10x18x4xf32> to vector<8x16x4xf32>
    %22 = tpu.concatenate %18, %19, %20, %21 in 2 : vector<8x16x4xf32>, vector<8x16x4xf32>, vector<8x16x4xf32>, vector<8x16x4xf32> -> vector<8x16x16xf32>
    %23 = vector.shape_cast %22 : vector<8x16x16xf32> to vector<128x16xf32>
    %c1 = arith.constant 1 : index
    %c0_14 = arith.constant 0 : index
    %c0_15 = arith.constant 0 : index
    %24 = vector.load %arg3[%c1, %c0_14, %c0_15] : memref<4x16x4xf32, #tpu.memory_space<vmem>>, vector<1x16x4xf32>
    %25 = vector.shape_cast %24 : vector<1x16x4xf32> to vector<16x4xf32>
    %cst_16 = arith.constant dense<0.000000e+00> : vector<128x4xf32>
    %26 = tpu.matmul %23, %25, %cst_16 {dimension_numbers = #tpu.dot_dimension_numbers<[1], [0], [0], [1], [0, 0, 1, 1], [], []>} : vector<128x16xf32>, vector<16x4xf32>, vector<128x4xf32> -> vector<128x4xf32>
    %27 = vector.broadcast %2 : vector<1x4xf32> to vector<128x4xf32>
    %28 = arith.addf %26, %27 : vector<128x4xf32>
    %29 = vector.shape_cast %28 : vector<128x4xf32> to vector<8x16x4xf32>
    %c0_17 = arith.constant 0 : index
    %c1_18 = arith.constant 1 : index
    %c0_19 = arith.constant 0 : index
    %c0_20 = arith.constant 0 : index
    %c0_21 = arith.constant 0 : index
    %30 = vector.load %arg5[%c0_17, %c1_18, %c0_19, %c0_20, %c0_21] : memref<1x4x8x16x4xf32, #tpu.memory_space<vmem>>, vector<1x1x8x16x4xf32>
    %31 = vector.shape_cast %30 : vector<1x1x8x16x4xf32> to vector<8x16x4xf32>
    %32 = vector.shape_cast %29 : vector<8x16x4xf32> to vector<1x1x8x16x4xf32>
    tpu.vector_store %arg5[%c0_17, %c1_18, %c0_19, %c0_20, %c0_21], %32 {strides = array<i32>} : memref<1x4x8x16x4xf32, #tpu.memory_space<vmem>>, vector<1x1x8x16x4xf32>,
    %33 = vector.extract_strided_slice %1 {offsets = [1, 0, 0], sizes = [8, 16, 4], strides = [1, 1, 1]} : vector<10x18x4xf32> to vector<8x16x4xf32>
    %34 = vector.extract_strided_slice %1 {offsets = [1, 1, 0], sizes = [8, 16, 4], strides = [1, 1, 1]} : vector<10x18x4xf32> to vector<8x16x4xf32>
    %35 = vector.extract_strided_slice %1 {offsets = [2, 0, 0], sizes = [8, 16, 4], strides = [1, 1, 1]} : vector<10x18x4xf32> to vector<8x16x4xf32>
    %36 = vector.extract_strided_slice %1 {offsets = [2, 1, 0], sizes = [8, 16, 4], strides = [1, 1, 1]} : vector<10x18x4xf32> to vector<8x16x4xf32>
    %37 = tpu.concatenate %33, %34, %35, %36 in 2 : vector<8x16x4xf32>, vector<8x16x4xf32>, vector<8x16x4xf32>, vector<8x16x4xf32> -> vector<8x16x16xf32>
    %38 = vector.shape_cast %37 : vector<8x16x16xf32> to vector<128x16xf32>
    %c2 = arith.constant 2 : index
    %c0_22 = arith.constant 0 : index
    %c0_23 = arith.constant 0 : index
    %39 = vector.load %arg3[%c2, %c0_22, %c0_23] : memref<4x16x4xf32, #tpu.memory_space<vmem>>, vector<1x16x4xf32>
    %40 = vector.shape_cast %39 : vector<1x16x4xf32> to vector<16x4xf32>
    %cst_24 = arith.constant dense<0.000000e+00> : vector<128x4xf32>
    %41 = tpu.matmul %38, %40, %cst_24 {dimension_numbers = #tpu.dot_dimension_numbers<[1], [0], [0], [1], [0, 0, 1, 1], [], []>} : vector<128x16xf32>, vector<16x4xf32>, vector<128x4xf32> -> vector<128x4xf32>
    %42 = vector.broadcast %2 : vector<1x4xf32> to vector<128x4xf32>
    %43 = arith.addf %41, %42 : vector<128x4xf32>
    %44 = vector.shape_cast %43 : vector<128x4xf32> to vector<8x16x4xf32>
    %c0_25 = arith.constant 0 : index
    %c2_26 = arith.constant 2 : index
    %c0_27 = arith.constant 0 : index
    %c0_28 = arith.constant 0 : index
    %c0_29 = arith.constant 0 : index
    %45 = vector.load %arg5[%c0_25, %c2_26, %c0_27, %c0_28, %c0_29] : memref<1x4x8x16x4xf32, #tpu.memory_space<vmem>>, vector<1x1x8x16x4xf32>
    %46 = vector.shape_cast %45 : vector<1x1x8x16x4xf32> to vector<8x16x4xf32>
    %47 = vector.shape_cast %44 : vector<8x16x4xf32> to vector<1x1x8x16x4xf32>
    tpu.vector_store %arg5[%c0_25, %c2_26, %c0_27, %c0_28, %c0_29], %47 {strides = array<i32>} : memref<1x4x8x16x4xf32, #tpu.memory_space<vmem>>, vector<1x1x8x16x4xf32>,
    %48 = vector.extract_strided_slice %1 {offsets = [1, 1, 0], sizes = [8, 16, 4], strides = [1, 1, 1]} : vector<10x18x4xf32> to vector<8x16x4xf32>
    %49 = vector.extract_strided_slice %1 {offsets = [1, 2, 0], sizes = [8, 16, 4], strides = [1, 1, 1]} : vector<10x18x4xf32> to vector<8x16x4xf32>
    %50 = vector.extract_strided_slice %1 {offsets = [2, 1, 0], sizes = [8, 16, 4], strides = [1, 1, 1]} : vector<10x18x4xf32> to vector<8x16x4xf32>
    %51 = vector.extract_strided_slice %1 {offsets = [2, 2, 0], sizes = [8, 16, 4], strides = [1, 1, 1]} : vector<10x18x4xf32> to vector<8x16x4xf32>
    %52 = tpu.concatenate %48, %49, %50, %51 in 2 : vector<8x16x4xf32>, vector<8x16x4xf32>, vector<8x16x4xf32>, vector<8x16x4xf32> -> vector<8x16x16xf32>
    %53 = vector.shape_cast %52 : vector<8x16x16xf32> to vector<128x16xf32>
    %c3 = arith.constant 3 : index
    %c0_30 = arith.constant 0 : index
    %c0_31 = arith.constant 0 : index
    %54 = vector.load %arg3[%c3, %c0_30, %c0_31] : memref<4x16x4xf32, #tpu.memory_space<vmem>>, vector<1x16x4xf32>
    %55 = vector.shape_cast %54 : vector<1x16x4xf32> to vector<16x4xf32>
    %cst_32 = arith.constant dense<0.000000e+00> : vector<128x4xf32>
    %56 = tpu.matmul %53, %55, %cst_32 {dimension_numbers = #tpu.dot_dimension_numbers<[1], [0], [0], [1], [0, 0, 1, 1], [], []>} : vector<128x16xf32>, vector<16x4xf32>, vector<128x4xf32> -> vector<128x4xf32>
    %57 = vector.broadcast %2 : vector<1x4xf32> to vector<128x4xf32>
    %58 = arith.addf %56, %57 : vector<128x4xf32>
    %59 = vector.shape_cast %58 : vector<128x4xf32> to vector<8x16x4xf32>
    %c0_33 = arith.constant 0 : index
    %c3_34 = arith.constant 3 : index
    %c0_35 = arith.constant 0 : index
    %c0_36 = arith.constant 0 : index
    %c0_37 = arith.constant 0 : index
    %60 = vector.load %arg5[%c0_33, %c3_34, %c0_35, %c0_36, %c0_37] : memref<1x4x8x16x4xf32, #tpu.memory_space<vmem>>, vector<1x1x8x16x4xf32>
    %61 = vector.shape_cast %60 : vector<1x1x8x16x4xf32> to vector<8x16x4xf32>
    %62 = vector.shape_cast %59 : vector<8x16x4xf32> to vector<1x1x8x16x4xf32>
    tpu.vector_store %arg5[%c0_33, %c3_34, %c0_35, %c0_36, %c0_37], %62 {strides = array<i32>} : memref<1x4x8x16x4xf32, #tpu.memory_space<vmem>>, vector<1x1x8x16x4xf32>,
    return
  }
  func.func @transform_0(%arg0: i32, %arg1: i32) -> (i32, i32, i32, i32, i32) {
    %c0_i32 = arith.constant 0 : i32
    %c0_i32_0 = arith.constant 0 : i32
    %c0_i32_1 = arith.constant 0 : i32
    %c0_i32_2 = arith.constant 0 : i32
    return %arg0, %arg1, %c0_i32, %c0_i32_0, %c0_i32_1 : i32, i32, i32, i32, i32
  }
  func.func @transform_1(%arg0: i32, %arg1: i32) -> (i32, i32, i32) {
    %c0_i32 = arith.constant 0 : i32
    %c0_i32_0 = arith.constant 0 : i32
    %c0_i32_1 = arith.constant 0 : i32
    %c0_i32_2 = arith.constant 0 : i32
    return %c0_i32, %c0_i32_0, %c0_i32_1 : i32, i32, i32
  }
  func.func @transform_2(%arg0: i32, %arg1: i32) -> (i32, i32) {
    %c0_i32 = arith.constant 0 : i32
    %c0_i32_0 = arith.constant 0 : i32
    %c0_i32_1 = arith.constant 0 : i32
    return %c0_i32, %c0_i32_0 : i32, i32
  }
  func.func @transform_3(%arg0: i32, %arg1: i32) -> (i32, i32, i32, i32, i32) {
    %c0_i32 = arith.constant 0 : i32
    %c0_i32_0 = arith.constant 0 : i32
    %c0_i32_1 = arith.constant 0 : i32
    %c0_i32_2 = arith.constant 0 : i32
    return %arg0, %c0_i32, %arg1, %c0_i32_0, %c0_i32_1 : i32, i32, i32, i32, i32
  }
}

</mosaic_0001>

<llo_original>
// kernel: upsample_forward.1
$region0: #{upsample_forward.1}
  #allocation0 [shape = 'u32[]', space=smem, size = 0x4, offset = 0x4, fixed_abs, tag = 'smem constant byte address 0x4 - core index']
  #allocation1 [shape = 'u32[144,128]{1,0:T(1,128)}', space=vmem, size = 0x12000, scoped, tag = 'internal scratch']
  #allocation9 [shape = 's32[]', space=sflag, size = 0x4, offset = 0, fixed_abs, tag = 'sflag constant byte address 0x0 - dummy sync flag']
  %s0 = inlined_call_operand.hbm [shape: f32[2,2,10,18,4], index: 0, kind: input, shape index: {}]
  %s1 = inlined_call_operand.hbm [shape: f32[4,16,4], index: 1, kind: input, shape index: {}]
  %s2 = inlined_call_operand.hbm [shape: f32[1,4], index: 2, kind: input, shape index: {}]
  %s3 = inlined_call_operand.hbm [shape: f32[2,4,16,16,4], index: 3, kind: output, shape index: {}]
  %s4 = sld [smem:[#allocation0]]
  $region57: #{upsample_forward.1} parent=0
    _
  %s6 = ssub.s32 1, %s4
  %s7 = scalar_select 0, %s6, %s4
  $region1: #{upsample_forward.1} parent=0
    #allocation2 [shape = 'u8[245760]{0}', space=vmem, size = 0x3c000, scoped, tag = 'input window, operand 0']
    #allocation3 [shape = 's32[2]{0}', space=sflag, size = 0x8, scoped, tag = 'scoped memory for upsample_forward.1']
    #allocation4 [shape = 's32[2]{0}', space=sflag, size = 0x8, scoped, tag = 'scoped memory for upsample_forward.1']
    #allocation5 [shape = 'u8[32768]{0}', space=vmem, size = 0x8000, scoped, tag = 'input window, operand 1, single buffered']
    #allocation6 [shape = 's32[1]{0}', space=sflag, size = 0x4, scoped, tag = 'scoped memory for upsample_forward.1']
    #allocation7 [shape = 'u8[512]{0}', space=vmem, size = 0x400, scoped, tag = 'input window, operand 2, single buffered']
    #allocation8 [shape = 'u8[524288]{0}', space=vmem, size = 0x80000, scoped, tag = 'output window, operand 0']
    %8 = vsyncpa [#allocation3], 0
    %s9 = scalar_lea.sflag [#allocation3], 1
    %10 = vsyncpa %s9, 0
    %11 = vsyncpa [#allocation6], 0
    %12 = vsyncpa [#allocation4], 0
    %s13 = scalar_lea.sflag [#allocation4], 1
    %14 = vsyncpa %s13, 0
    loop: start=0, step=1, limit=6
    $region2: #{upsample_forward.1} parent=1 // loop_pre_header
      _
    $region3: #{upsample_forward.1} parent=1 // loop_header
      %s16 = sphi 0, %s20
      %p17 = scmp.ge.s32.totalorder %s16, 6
      %s23 = sphi 0, %s35
      %s24 = sphi 0, %s31
      %s25 = sphi 0, %s23
      %s26 = sphi 0, %s24
      %s27 = sphi 0, %s25
      %s28 = sphi 0, %s26
      %s40 = sphi 0, %s42
      %s43 = sphi 0, %s40
      %s44 = sphi 0, %s43
      %s60 = sphi 0, %s44
      %s64 = sphi 0, %s64
      %s66 = sphi 0, %s64
      %s67 = sphi 0, %s66
      %s81 = sphi 0, %s67
      %s85 = sphi 0, %s85
      %s87 = sphi 0, %s85
      %s88 = sphi 0, %s87
      %s102 = sphi 0, %s88
      %s110 = sphi 0, %s112
      %s113 = sphi 0, %s110
      %s114 = sphi 0, %s113
      %s130 = sphi 0, %s114
    $region4: #{upsample_forward.1} parent=1 // loop_header_branch
      %19 = sbr.rel (%p17) target = $region8
    $region5: #{upsample_forward.1} parent=1 // loop_body
      %s21 = ssub.s32 %s16, 1
      %s22 = ssub.s32 %s16, 2
      %s29 = sadd.s32 1, %s24
      %p30 = scmp.ge.s32.totalorder %s29, 2
      %s31 = scalar_select %p30, 0, %s29
      %s32 = sadd.s32 1, %s23
      %s33 = scalar_select %p30, %s32, %s23
      %p34 = scmp.ge.s32.totalorder %s33, 2
      %s35 = scalar_select %p34, 0, %s33
      %s36 = ssub.s32 %s23, %s35
      %s37 = ssub.s32 %s24, %s31
      %s38 = sor.u32 %s36, %s37
      %p39 = scmp.eq.s32.totalorder %s38, 0
      %s41 = sadd.s32 %s40, 1
      %s42 = scalar_select %p39, %s40, %s41
      %p45 = pneg %p39
      %p46 = scmp.eq.s32.totalorder %s16, 3
      %p47 = por %p45, %p46
      %p48 = scmp.ne.s32.totalorder %s40, %s43
      %p49 = scmp.eq.s32.totalorder %s16, 0
      %p50 = por %p48, %p49
      %p51 = scmp.ne.s32.totalorder %s40, %s43
      %p52 = scmp.eq.s32.totalorder %s21, 3
      %p53 = por %p51, %p52
      %p54 = scmp.ne.s32.totalorder %s43, %s44
      %p55 = scmp.eq.s32.totalorder %s21, 0
      %p56 = por %p54, %p55
      %p57 = scmp.ne.s32.totalorder %s43, %s44
      %p58 = scmp.eq.s32.totalorder %s22, 3
      %p59 = por %p57, %p58
      %p61 = scmp.ne.s32.totalorder %s44, %s60
      %p62 = scmp.eq.s32.totalorder %s22, 0
      %p63 = por %p61, %p62
      %s65 = sadd.s32 %s64, 1
      %p68 = scmp.eq.s32.totalorder %s16, 3
      %p69 = scmp.ne.s32.totalorder %s64, %s66
      %p70 = scmp.eq.s32.totalorder %s16, 0
      %p71 = por %p69, %p70
      %p72 = scmp.ne.s32.totalorder %s64, %s66
      %p73 = scmp.eq.s32.totalorder %s21, 3
      %p74 = por %p72, %p73
      %p75 = scmp.ne.s32.totalorder %s66, %s67
      %p76 = scmp.eq.s32.totalorder %s21, 0
      %p77 = por %p75, %p76
      %p78 = scmp.ne.s32.totalorder %s66, %s67
      %p79 = scmp.eq.s32.totalorder %s22, 3
      %p80 = por %p78, %p79
      %p82 = scmp.ne.s32.totalorder %s67, %s81
      %p83 = scmp.eq.s32.totalorder %s22, 0
      %p84 = por %p82, %p83
      %s86 = sadd.s32 %s85, 1
      %p89 = scmp.eq.s32.totalorder %s16, 3
      %p90 = scmp.ne.s32.totalorder %s85, %s87
      %p91 = scmp.eq.s32.totalorder %s16, 0
      %p92 = por %p90, %p91
      %p93 = scmp.ne.s32.totalorder %s85, %s87
      %p94 = scmp.eq.s32.totalorder %s21, 3
      %p95 = por %p93, %p94
      %p96 = scmp.ne.s32.totalorder %s87, %s88
      %p97 = scmp.eq.s32.totalorder %s21, 0
      %p98 = por %p96, %p97
      %p99 = scmp.ne.s32.totalorder %s87, %s88
      %p100 = scmp.eq.s32.totalorder %s22, 3
      %p101 = por %p99, %p100
      %p103 = scmp.ne.s32.totalorder %s88, %s102
      %p104 = scmp.eq.s32.totalorder %s22, 0
      %p105 = por %p103, %p104
      %s106 = ssub.s32 %s23, %s35
      %s107 = ssub.s32 %s24, %s31
      %s108 = sor.u32 %s106, %s107
      %p109 = scmp.eq.s32.totalorder %s108, 0
      %s111 = sadd.s32 %s110, 1
      %s112 = scalar_select %p109, %s110, %s111
      %p115 = pneg %p109
      %p116 = scmp.eq.s32.totalorder %s16, 3
      %p117 = por %p115, %p116
      %p118 = scmp.ne.s32.totalorder %s110, %s113
      %p119 = scmp.eq.s32.totalorder %s16, 0
      %p120 = por %p118, %p119
      %p121 = scmp.ne.s32.totalorder %s110, %s113
      %p122 = scmp.eq.s32.totalorder %s21, 3
      %p123 = por %p121, %p122
      %p124 = scmp.ne.s32.totalorder %s113, %s114
      %p125 = scmp.eq.s32.totalorder %s21, 0
      %p126 = por %p124, %p125
      %p127 = scmp.ne.s32.totalorder %s113, %s114
      %p128 = scmp.eq.s32.totalorder %s22, 3
      %p129 = por %p127, %p128
      %p131 = scmp.ne.s32.totalorder %s114, %s130
      %p132 = scmp.eq.s32.totalorder %s22, 0
      %p133 = por %p131, %p132
      %p134 = scmp.le.s32.totalorder 1, %s16
      %p135 = scmp.lt.s32.totalorder %s16, 5
      %p136 = pnand %p134, %p135
      %p137 = pneg %p136
      // Predicated region
      $region9: #{upsample_forward.1} parent=5 // pred_check
        _
      $region10: #{upsample_forward.1} parent=5 // pred_check_branch
        %139 = sbr.rel (%p136) target = $region12
      $region11: #{upsample_forward.1} parent=5 // pred_region
        %s140 = ssub.s32 %s16, 1
        // Predicated region
        $region13: #{upsample_forward.1} parent=11 // pred_check
          %p141 = pneg %p77
        $region14: #{upsample_forward.1} parent=11 // pred_check_branch
          %143 = sbr.rel (%p141) target = $region16
        $region15: #{upsample_forward.1} parent=11 // pred_region
          %s145 = ssub.s32 1024, 1024
          %146 = vsyncadd [#allocation6], %s145
          %s147 = sshll.u32 [#allocation5], 4
          %s148 = int_to_ptr.vmem [resolvable:$true] %s147
          %153 = dma.hbm_to_vmem [thread:$0]  %s1, 1024, %s148, [#allocation6], 128, 128, 8
        $region16: #{upsample_forward.1} parent=11 // pred_fallthru
          _
        // Predicated region
        $region17: #{upsample_forward.1} parent=11 // pred_check
          %p154 = pneg %p98
        $region18: #{upsample_forward.1} parent=11 // pred_check_branch
          %156 = sbr.rel (%p154) target = $region20
        $region19: #{upsample_forward.1} parent=11 // pred_region
          %s158 = ssub.s32 16, 16
          %159 = vsyncadd [#allocation6], %s158
          %s161 = sshll.u32 [#allocation7], 4
          %s162 = int_to_ptr.vmem [resolvable:$true] %s161
          %164 = dma.hbm_to_vmem [thread:$0]  %s2, 16, %s162, [#allocation6]
        $region20: #{upsample_forward.1} parent=11 // pred_fallthru
          _
      $region12: #{upsample_forward.1} parent=5 // pred_fallthru
        _
      %p165 = scmp.lt.s32.totalorder %s16, 4
      // Predicated region
      $region21: #{upsample_forward.1} parent=5 // pred_check
        %p166 = pneg %p165
      $region22: #{upsample_forward.1} parent=5 // pred_check_branch
        %168 = sbr.rel (%p166) target = $region24
      $region23: #{upsample_forward.1} parent=5 // pred_region
        // Predicated region
        $region25: #{upsample_forward.1} parent=23 // pred_check
          %p169 = pneg %p50
        $region26: #{upsample_forward.1} parent=23 // pred_check_branch
          %171 = sbr.rel (%p169) target = $region28
        $region27: #{upsample_forward.1} parent=23 // pred_region
          %s172 = sand.u32 %s40, 1
          %s173 = scalar_lea.sflag [#allocation3], %s172
          %s174 = sand.u32 %s40, 1
          %s175 = smul.addr %s174, 240
          %s176 = scalar_lea.vmem [#allocation2], %s175
          %s178 = ssub.s32 3840, 3840
          %179 = vsyncadd %s173, %s178
          %s180 = smul.addr %s24, 30
          %s181 = smul.addr %s23, 60
          %s182 = sadd.s32 %s180, %s181
          %s183 = smul.addr %s182, 128
          %s184 = scalar_lea.hbm %s0, %s183
          %s185 = sshll.u32 %s176, 4
          %s186 = int_to_ptr.vmem [resolvable:$true] %s185
          %191 = dma.hbm_to_vmem [thread:$0]  %s184, 3840, %s186, %s173, 128, 128, 8
        $region28: #{upsample_forward.1} parent=23 // pred_fallthru
          _
      $region24: #{upsample_forward.1} parent=5 // pred_fallthru
        _
      %p192 = scmp.le.s32.totalorder 1, %s16
      %p193 = scmp.lt.s32.totalorder %s16, 5
      %p194 = pnand %p192, %p193
      %p195 = pneg %p194
      // Predicated region
      $region29: #{upsample_forward.1} parent=5 // pred_check
        _
      $region30: #{upsample_forward.1} parent=5 // pred_check_branch
        %197 = sbr.rel (%p194) target = $region32
      $region31: #{upsample_forward.1} parent=5 // pred_region
        %s198 = ssub.s32 %s16, 1
        %s199 = sand.u32 %s43, 1
        %s200 = scalar_lea.sflag [#allocation3], %s199
        %s201 = sand.u32 %s43, 1
        %s202 = smul.addr %s201, 240
        %s203 = scalar_lea.vmem [#allocation2], %s202
        // Predicated region
        $region33: #{upsample_forward.1} parent=31 // pred_check
          %p204 = pneg %p56
        $region34: #{upsample_forward.1} parent=31 // pred_check_branch
          %206 = sbr.rel (%p204) target = $region36
        $region35: #{upsample_forward.1} parent=31 // pred_region
          %207 = dma.done %s200, 3840
        $region36: #{upsample_forward.1} parent=31 // pred_fallthru
          _
        // Predicated region
        $region37: #{upsample_forward.1} parent=31 // pred_check
          %p208 = pneg %p77
        $region38: #{upsample_forward.1} parent=31 // pred_check_branch
          %210 = sbr.rel (%p208) target = $region40
        $region39: #{upsample_forward.1} parent=31 // pred_region
          %211 = dma.done [#allocation6], 1024
        $region40: #{upsample_forward.1} parent=31 // pred_fallthru
          _
        // Predicated region
        $region41: #{upsample_forward.1} parent=31 // pred_check
          %p212 = pneg %p98
        $region42: #{upsample_forward.1} parent=31 // pred_check_branch
          %214 = sbr.rel (%p212) target = $region44
        $region43: #{upsample_forward.1} parent=31 // pred_region
          %215 = dma.done [#allocation6], 16
        $region44: #{upsample_forward.1} parent=31 // pred_fallthru
          _
        %s216 = sand.u32 %s43, 1
        %s217 = scalar_lea.sflag [#allocation3], %s216
        %s218 = sand.u32 %s43, 1
        %s219 = smul.addr %s218, 240
        %s220 = scalar_lea.vmem [#allocation2], %s219
        %p221 = pneg %p56
        %p222 = pneg %p53
        %p223 = pneg %p77
        %p224 = pneg %p74
        %p225 = pneg %p98
        %p226 = pneg %p95
        %p227 = pneg %p126
        %p228 = pneg %p123
        %s229 = sand.u32 %s113, 1
        %s230 = scalar_lea.sflag [#allocation4], %s229
        %s231 = sand.u32 %s113, 1
        %s232 = smul.addr %s231, 512
        %s233 = scalar_lea.vmem [#allocation8], %s232
        %s234 = smul.u32 8, %s26
        %v235 = vld [vmem:[%s203] sm:$0xff]
        %v236 = vld [vmem:[%s203 + $0x8] sm:$0xff]
        %v237 = vld [vmem:[%s203 + $0x10] sm:$0x3]
        %v238 = vld [vmem:[%s203 + $0x18] sm:$0xff]
        %v239 = vld [vmem:[%s203 + $0x20] sm:$0xff]
        %v240 = vld [vmem:[%s203 + $0x28] sm:$0x3]
        %v241 = vld [vmem:[%s203 + $0x30] sm:$0xff]
        %v242 = vld [vmem:[%s203 + $0x38] sm:$0xff]
        %v243 = vld [vmem:[%s203 + $0x40] sm:$0x3]
        %v244 = vld [vmem:[%s203 + $0x48] sm:$0xff]
        %v245 = vld [vmem:[%s203 + $0x50] sm:$0xff]
        %v246 = vld [vmem:[%s203 + $0x58] sm:$0x3]
        %v247 = vld [vmem:[%s203 + $0x60] sm:$0xff]
        %v248 = vld [vmem:[%s203 + $0x68] sm:$0xff]
        %v249 = vld [vmem:[%s203 + $0x70] sm:$0x3]
        %v250 = vld [vmem:[%s203 + $0x78] sm:$0xff]
        %v251 = vld [vmem:[%s203 + $0x80] sm:$0xff]
        %v252 = vld [vmem:[%s203 + $0x88] sm:$0x3]
        %v253 = vld [vmem:[%s203 + $0x90] sm:$0xff]
        %v254 = vld [vmem:[%s203 + $0x98] sm:$0xff]
        %v255 = vld [vmem:[%s203 + $0xa0] sm:$0x3]
        %v256 = vld [vmem:[%s203 + $0xa8] sm:$0xff]
        %v257 = vld [vmem:[%s203 + $0xb0] sm:$0xff]
        %v258 = vld [vmem:[%s203 + $0xb8] sm:$0x3]
        %v259 = vld [vmem:[%s203 + $0xc0] sm:$0xff]
        %v260 = vld [vmem:[%s203 + $0xc8] sm:$0xff]
        %v261 = vld [vmem:[%s203 + $0xd0] sm:$0x3]
        %v262 = vld [vmem:[%s203 + $0xd8] sm:$0xff]
        %v263 = vld [vmem:[%s203 + $0xe0] sm:$0xff]
        %v264 = vld [vmem:[%s203 + $0xe8] sm:$0x3]
        %v265 = vld [vmem:[#allocation7] sm:$0x1]
        %vm290 = vcmask 1046528
        %v291 = vrot.slane %v235, 1
        %v292 = vrot.slane %v236, 1
        %v293 = vsel %vm290, %v291, %v292
        %v294 = vrot.slane %v237, 1
        %v295 = vsel %vm290, %v292, %v294
        %v296 = vrot.slane %v238, 1
        %v297 = vrot.slane %v239, 1
        %v298 = vsel %vm290, %v296, %v297
        %v299 = vrot.slane %v240, 1
        %v300 = vsel %vm290, %v297, %v299
        %v301 = vrot.slane %v241, 1
        %v302 = vrot.slane %v242, 1
        %v303 = vsel %vm290, %v301, %v302
        %v304 = vrot.slane %v243, 1
        %v305 = vsel %vm290, %v302, %v304
        %v306 = vrot.slane %v244, 1
        %v307 = vrot.slane %v245, 1
        %v308 = vsel %vm290, %v306, %v307
        %v309 = vrot.slane %v246, 1
        %v310 = vsel %vm290, %v307, %v309
        %v311 = vrot.slane %v247, 1
        %v312 = vrot.slane %v248, 1
        %v313 = vsel %vm290, %v311, %v312
        %v314 = vrot.slane %v249, 1
        %v315 = vsel %vm290, %v312, %v314
        %v316 = vrot.slane %v250, 1
        %v317 = vrot.slane %v251, 1
        %v318 = vsel %vm290, %v316, %v317
        %v319 = vrot.slane %v252, 1
        %v320 = vsel %vm290, %v317, %v319
        %v321 = vrot.slane %v253, 1
        %v322 = vrot.slane %v254, 1
        %v323 = vsel %vm290, %v321, %v322
        %v324 = vrot.slane %v255, 1
        %v325 = vsel %vm290, %v322, %v324
        %v326 = vrot.slane %v256, 1
        %v327 = vrot.slane %v257, 1
        %v328 = vsel %vm290, %v326, %v327
        %v329 = vrot.slane %v258, 1
        %v330 = vsel %vm290, %v327, %v329
        %331 = vrot.lane.b32.xlu0 %v293, 4
        %v332 = vpop.permute.xlu0 %331
        %333 = vrot.lane.b32.xlu0 %v295, 4
        %v334 = vpop.permute.xlu0 %333
        %335 = vrot.lane.b32.xlu0 %v298, 4
        %v336 = vpop.permute.xlu0 %335
        %337 = vrot.lane.b32.xlu0 %v300, 4
        %v338 = vpop.permute.xlu0 %337
        %339 = vrot.lane.b32.xlu0 %v303, 4
        %v340 = vpop.permute.xlu0 %339
        %341 = vrot.lane.b32.xlu0 %v305, 4
        %v342 = vpop.permute.xlu0 %341
        %343 = vrot.lane.b32.xlu0 %v308, 4
        %v344 = vpop.permute.xlu0 %343
        %345 = vrot.lane.b32.xlu0 %v310, 4
        %v346 = vpop.permute.xlu0 %345
        %347 = vrot.lane.b32.xlu0 %v313, 4
        %v348 = vpop.permute.xlu0 %347
        %349 = vrot.lane.b32.xlu0 %v315, 4
        %v350 = vpop.permute.xlu0 %349
        %351 = vrot.lane.b32.xlu0 %v318, 4
        %v352 = vpop.permute.xlu0 %351
        %353 = vrot.lane.b32.xlu0 %v320, 4
        %v354 = vpop.permute.xlu0 %353
        %355 = vrot.lane.b32.xlu0 %v323, 4
        %v356 = vpop.permute.xlu0 %355
        %357 = vrot.lane.b32.xlu0 %v325, 4
        %v358 = vpop.permute.xlu0 %357
        %359 = vrot.lane.b32.xlu0 %v328, 4
        %v360 = vpop.permute.xlu0 %359
        %361 = vrot.lane.b32.xlu0 %v330, 4
        %v362 = vpop.permute.xlu0 %361
        %381 = vrot.lane.b32.xlu0 %v238, 8
        %v382 = vpop.permute.xlu0 %381
        %383 = vrot.lane.b32.xlu0 %v239, 8
        %v384 = vpop.permute.xlu0 %383
        %385 = vrot.lane.b32.xlu0 %v241, 8
        %v386 = vpop.permute.xlu0 %385
        %387 = vrot.lane.b32.xlu0 %v242, 8
        %v388 = vpop.permute.xlu0 %387
        %389 = vrot.lane.b32.xlu0 %v244, 8
        %v390 = vpop.permute.xlu0 %389
        %391 = vrot.lane.b32.xlu0 %v245, 8
        %v392 = vpop.permute.xlu0 %391
        %393 = vrot.lane.b32.xlu0 %v247, 8
        %v394 = vpop.permute.xlu0 %393
        %395 = vrot.lane.b32.xlu0 %v248, 8
        %v396 = vpop.permute.xlu0 %395
        %397 = vrot.lane.b32.xlu0 %v250, 8
        %v398 = vpop.permute.xlu0 %397
        %399 = vrot.lane.b32.xlu0 %v251, 8
        %v400 = vpop.permute.xlu0 %399
        %401 = vrot.lane.b32.xlu0 %v253, 8
        %v402 = vpop.permute.xlu0 %401
        %403 = vrot.lane.b32.xlu0 %v254, 8
        %v404 = vpop.permute.xlu0 %403
        %405 = vrot.lane.b32.xlu0 %v256, 8
        %v406 = vpop.permute.xlu0 %405
        %407 = vrot.lane.b32.xlu0 %v257, 8
        %v408 = vpop.permute.xlu0 %407
        %409 = vrot.lane.b32.xlu0 %v259, 8
        %v410 = vpop.permute.xlu0 %409
        %411 = vrot.lane.b32.xlu0 %v260, 8
        %v412 = vpop.permute.xlu0 %411
        %v430 = vrot.slane %v259, 1
        %v431 = vrot.slane %v260, 1
        %v432 = vsel %vm290, %v430, %v431
        %v433 = vrot.slane %v261, 1
        %v434 = vsel %vm290, %v431, %v433
        %435 = vrot.lane.b32.xlu0 %v298, 12
        %v436 = vpop.permute.xlu0 %435
        %437 = vrot.lane.b32.xlu0 %v300, 12
        %v438 = vpop.permute.xlu0 %437
        %439 = vrot.lane.b32.xlu0 %v303, 12
        %v440 = vpop.permute.xlu0 %439
        %441 = vrot.lane.b32.xlu0 %v305, 12
        %v442 = vpop.permute.xlu0 %441
        %443 = vrot.lane.b32.xlu0 %v308, 12
        %v444 = vpop.permute.xlu0 %443
        %445 = vrot.lane.b32.xlu0 %v310, 12
        %v446 = vpop.permute.xlu0 %445
        %447 = vrot.lane.b32.xlu0 %v313, 12
        %v448 = vpop.permute.xlu0 %447
        %449 = vrot.lane.b32.xlu0 %v315, 12
        %v450 = vpop.permute.xlu0 %449
        %451 = vrot.lane.b32.xlu0 %v318, 12
        %v452 = vpop.permute.xlu0 %451
        %453 = vrot.lane.b32.xlu0 %v320, 12
        %v454 = vpop.permute.xlu0 %453
        %455 = vrot.lane.b32.xlu0 %v323, 12
        %v456 = vpop.permute.xlu0 %455
        %457 = vrot.lane.b32.xlu0 %v325, 12
        %v458 = vpop.permute.xlu0 %457
        %459 = vrot.lane.b32.xlu0 %v328, 12
        %v460 = vpop.permute.xlu0 %459
        %461 = vrot.lane.b32.xlu0 %v330, 12
        %v462 = vpop.permute.xlu0 %461
        %463 = vrot.lane.b32.xlu0 %v432, 12
        %v464 = vpop.permute.xlu0 %463
        %465 = vrot.lane.b32.xlu0 %v434, 12
        %v466 = vpop.permute.xlu0 %465
        %vm483 = vcmask 31744
        %v484 = vsel %vm483, %v235, %v332
        %v485 = vsel %vm483, %v236, %v334
        %v486 = vsel %vm483, %v238, %v336
        %v487 = vsel %vm483, %v239, %v338
        %v488 = vsel %vm483, %v241, %v340
        %v489 = vsel %vm483, %v242, %v342
        %v490 = vsel %vm483, %v244, %v344
        %v491 = vsel %vm483, %v245, %v346
        %v492 = vsel %vm483, %v247, %v348
        %v493 = vsel %vm483, %v248, %v350
        %v494 = vsel %vm483, %v250, %v352
        %v495 = vsel %vm483, %v251, %v354
        %v496 = vsel %vm483, %v253, %v356
        %v497 = vsel %vm483, %v254, %v358
        %v498 = vsel %vm483, %v256, %v360
        %v499 = vsel %vm483, %v257, %v362
        %vm500 = vcmask 64512
        %v501 = vsel %vm500, %v484, %v382
        %v502 = vsel %vm500, %v485, %v384
        %v503 = vsel %vm500, %v486, %v386
        %v504 = vsel %vm500, %v487, %v388
        %v505 = vsel %vm500, %v488, %v390
        %v506 = vsel %vm500, %v489, %v392
        %v507 = vsel %vm500, %v490, %v394
        %v508 = vsel %vm500, %v491, %v396
        %v509 = vsel %vm500, %v492, %v398
        %v510 = vsel %vm500, %v493, %v400
        %v511 = vsel %vm500, %v494, %v402
        %v512 = vsel %vm500, %v495, %v404
        %v513 = vsel %vm500, %v496, %v406
        %v514 = vsel %vm500, %v497, %v408
        %v515 = vsel %vm500, %v498, %v410
        %v516 = vsel %vm500, %v499, %v412
        %vm517 = vcmask 97280
        %v518 = vsel %vm517, %v501, %v436
        %v519 = vsel %vm517, %v502, %v438
        %v520 = vsel %vm517, %v503, %v440
        %v521 = vsel %vm517, %v504, %v442
        %v522 = vsel %vm517, %v505, %v444
        %v523 = vsel %vm517, %v506, %v446
        %v524 = vsel %vm517, %v507, %v448
        %v525 = vsel %vm517, %v508, %v450
        %v526 = vsel %vm517, %v509, %v452
        %v527 = vsel %vm517, %v510, %v454
        %v528 = vsel %vm517, %v511, %v456
        %v529 = vsel %vm517, %v512, %v458
        %v530 = vsel %vm517, %v513, %v460
        %v531 = vsel %vm517, %v514, %v462
        %v532 = vsel %vm517, %v515, %v464
        %v533 = vsel %vm517, %v516, %v466
        %v534 = vld [vmem:[#allocation5] sm:$0xff]
        %v535 = vld [vmem:[#allocation5 + $0x8] sm:$0xff]
        %v537 = vlaneseq
        %v538 = vshrl.u32 %v537, 7
        %v539 = vsub.s32 0, %v538
        %v540 = vrot.slane %v265, %v539
        %vm542 = vcmask 130048
        %v544 = vsel %vm542, %v518, 0
        %v547 = vsel %vm542, %v519, 0
        %v550 = vsel %vm542, %v520, 0
        %v553 = vsel %vm542, %v521, 0
        %v556 = vsel %vm542, %v522, 0
        %v559 = vsel %vm542, %v523, 0
        %v562 = vsel %vm542, %v524, 0
        %v565 = vsel %vm542, %v525, 0
        %v568 = vsel %vm542, %v526, 0
        %v571 = vsel %vm542, %v527, 0
        %v574 = vsel %vm542, %v528, 0
        %v577 = vsel %vm542, %v529, 0
        %v580 = vsel %vm542, %v530, 0
        %v583 = vsel %vm542, %v531, 0
        %v586 = vsel %vm542, %v532, 0
        %v589 = vsel %vm542, %v533, 0
        %591 = vmatprep.subr.mxu0 0.0
        %592 = vmatpush1.msra.mxu0 %v534
        %593 = vmatprep.subr.mxu0 0.0
        %594 = vmatpush1.msra.mxu0 %v535
        %595 = vmatprep.subr.mxu0 0.0
        %596 = vmatpush1.msra.mxu0 0.0
        %597 = vmatprep.subr.mxu0 0.0
        %598 = vmatpush1.msra.mxu0 0.0
        %599 = vmatprep.subr.mxu0 0.0
        %600 = vmatpush1.msra.mxu0 0.0
        %601 = vmatprep.subr.mxu0 0.0
        %602 = vmatpush1.msra.mxu0 0.0
        %603 = vmatprep.subr.mxu0 0.0
        %604 = vmatpush1.msra.mxu0 0.0
        %605 = vmatprep.subr.mxu0 0.0
        %606 = vmatpush1.msra.mxu0 0.0
        %607 = vmatprep.subr.mxu0 0.0
        %608 = vmatpush1.msra.mxu0 0.0
        %609 = vmatprep.subr.mxu0 0.0
        %610 = vmatpush1.msra.mxu0 0.0
        %611 = vmatprep.subr.mxu0 0.0
        %612 = vmatpush1.msra.mxu0 0.0
        %613 = vmatprep.subr.mxu0 0.0
        %614 = vmatpush1.msra.mxu0 0.0
        %615 = vmatprep.subr.mxu0 0.0
        %616 = vmatpush1.msra.mxu0 0.0
        %617 = vmatprep.subr.mxu0 0.0
        %618 = vmatpush1.msra.mxu0 0.0
        %619 = vmatprep.subr.mxu0 0.0
        %620 = vmatpush1.msra.mxu0 0.0
        %621 = vmatprep.subr.mxu0 0.0
        %622 = vmatpush1.msra.mxu0 0.0
        %623 = vmatprep.subr.mxu0 0.0
        %624 = vmatpush1.msra.mxu0 0.0
        %625 = vmatprep.subr.mxu0 0.0
        %626 = vmatpush1.msra.mxu0 0.0
        %627 = vmatprep.subr.mxu0 0.0
        %628 = vmatpush1.msra.mxu0 0.0
        %629 = vmatprep.subr.mxu0 0.0
        %630 = vmatpush1.msra.mxu0 0.0
        %631 = vmatprep.subr.mxu0 0.0
        %632 = vmatpush1.msra.mxu0 0.0
        %633 = vmatprep.subr.mxu0 0.0
        %634 = vmatpush1.msra.mxu0 0.0
        %635 = vmatprep.subr.mxu0 0.0
        %636 = vmatpush1.msra.mxu0 0.0
        %637 = vmatprep.subr.mxu0 0.0
        %638 = vmatpush1.msra.mxu0 0.0
        %639 = vmatprep.subr.mxu0 0.0
        %640 = vmatpush1.msra.mxu0 0.0
        %641 = vmatprep.subr.mxu0 0.0
        %642 = vmatpush1.msra.mxu0 0.0
        %643 = vmatprep.subr.mxu0 0.0
        %644 = vmatpush1.msra.mxu0 0.0
        %645 = vmatprep.subr.mxu0 0.0
        %646 = vmatpush1.msra.mxu0 0.0
        %647 = vmatprep.subr.mxu0 0.0
        %648 = vmatpush1.msra.mxu0 0.0
        %649 = vmatprep.subr.mxu0 0.0
        %650 = vmatpush1.msra.mxu0 0.0
        %651 = vmatprep.subr.mxu0 0.0
        %652 = vmatpush1.msra.mxu0 0.0
        %653 = vmatprep.subr.mxu0 0.0
        %654 = vmatpush1.msra.mxu0 0.0
        %655 = vmatprep.mubr.f32.mxu0 0.0
        %656 = vmatmul.mubr.f32.gmra.mrb[0].mxu0 %v544
        %v657 = vpop.f32.mrb[0].mxu0
        %v658 = vadd.f32 %v540, %v657
        %v659 = vpop.f32.mrb[0].mxu0
        %660 = vmatprep.mubr.f32.mxu0 0.0
        %661 = vmatmul.mubr.f32.gmra.mrb[0].mxu0 %v547
        %v662 = vpop.f32.mrb[0].mxu0
        %v663 = vadd.f32 %v540, %v662
        %v664 = vpop.f32.mrb[0].mxu0
        %665 = vmatprep.mubr.f32.mxu0 0.0
        %666 = vmatmul.mubr.f32.gmra.mrb[0].mxu0 %v550
        %v667 = vpop.f32.mrb[0].mxu0
        %v668 = vadd.f32 %v540, %v667
        %v669 = vpop.f32.mrb[0].mxu0
        %670 = vmatprep.mubr.f32.mxu0 0.0
        %671 = vmatmul.mubr.f32.gmra.mrb[0].mxu0 %v553
        %v672 = vpop.f32.mrb[0].mxu0
        %v673 = vadd.f32 %v540, %v672
        %v674 = vpop.f32.mrb[0].mxu0
        %675 = vmatprep.mubr.f32.mxu0 0.0
        %676 = vmatmul.mubr.f32.gmra.mrb[0].mxu0 %v556
        %v677 = vpop.f32.mrb[0].mxu0
        %v678 = vadd.f32 %v540, %v677
        %v679 = vpop.f32.mrb[0].mxu0
        %680 = vmatprep.mubr.f32.mxu0 0.0
        %681 = vmatmul.mubr.f32.gmra.mrb[0].mxu0 %v559
        %v682 = vpop.f32.mrb[0].mxu0
        %v683 = vadd.f32 %v540, %v682
        %v684 = vpop.f32.mrb[0].mxu0
        %685 = vmatprep.mubr.f32.mxu0 0.0
        %686 = vmatmul.mubr.f32.gmra.mrb[0].mxu0 %v562
        %v687 = vpop.f32.mrb[0].mxu0
        %v688 = vadd.f32 %v540, %v687
        %v689 = vpop.f32.mrb[0].mxu0
        %690 = vmatprep.mubr.f32.mxu0 0.0
        %691 = vmatmul.mubr.f32.gmra.mrb[0].mxu0 %v565
        %v692 = vpop.f32.mrb[0].mxu0
        %v693 = vadd.f32 %v540, %v692
        %v694 = vpop.f32.mrb[0].mxu0
        %695 = vmatprep.mubr.f32.mxu0 0.0
        %696 = vmatmul.mubr.f32.gmra.mrb[0].mxu0 %v568
        %v697 = vpop.f32.mrb[0].mxu0
        %v698 = vadd.f32 %v540, %v697
        %v699 = vpop.f32.mrb[0].mxu0
        %700 = vmatprep.mubr.f32.mxu0 0.0
        %701 = vmatmul.mubr.f32.gmra.mrb[0].mxu0 %v571
        %v702 = vpop.f32.mrb[0].mxu0
        %v703 = vadd.f32 %v540, %v702
        %v704 = vpop.f32.mrb[0].mxu0
        %705 = vmatprep.mubr.f32.mxu0 0.0
        %706 = vmatmul.mubr.f32.gmra.mrb[0].mxu0 %v574
        %v707 = vpop.f32.mrb[0].mxu0
        %v708 = vadd.f32 %v540, %v707
        %v709 = vpop.f32.mrb[0].mxu0
        %710 = vmatprep.mubr.f32.mxu0 0.0
        %711 = vmatmul.mubr.f32.gmra.mrb[0].mxu0 %v577
        %v712 = vpop.f32.mrb[0].mxu0
        %v713 = vadd.f32 %v540, %v712
        %v714 = vpop.f32.mrb[0].mxu0
        %715 = vmatprep.mubr.f32.mxu0 0.0
        %716 = vmatmul.mubr.f32.gmra.mrb[0].mxu0 %v580
        %v717 = vpop.f32.mrb[0].mxu0
        %v718 = vadd.f32 %v540, %v717
        %v719 = vpop.f32.mrb[0].mxu0
        %720 = vmatprep.mubr.f32.mxu0 0.0
        %721 = vmatmul.mubr.f32.gmra.mrb[0].mxu0 %v583
        %v722 = vpop.f32.mrb[0].mxu0
        %v723 = vadd.f32 %v540, %v722
        %v724 = vpop.f32.mrb[0].mxu0
        %725 = vmatprep.mubr.f32.mxu0 0.0
        %726 = vmatmul.mubr.f32.gmra.mrb[0].mxu0 %v586
        %v727 = vpop.f32.mrb[0].mxu0
        %v728 = vadd.f32 %v540, %v727
        %v729 = vpop.f32.mrb[0].mxu0
        %730 = vmatprep.mubr.f32.mxu0 0.0
        %731 = vmatmul.mubr.f32.gmra.mrb[0].mxu0 %v589
        %v732 = vpop.f32.mrb[0].mxu0
        %v733 = vadd.f32 %v540, %v732
        %v734 = vpop.f32.mrb[0].mxu0
        %735 = vdwg.mxu0
        %736 = vst.msk [vmem:[%s233] sm:$0xff] %vm483, %v658
        %737 = vst.msk [vmem:[%s233 + $0x8] sm:$0xff] %vm483, %v663
        %738 = vst.msk [vmem:[%s233 + $0x10] sm:$0xff] %vm483, %v668
        %739 = vst.msk [vmem:[%s233 + $0x18] sm:$0xff] %vm483, %v673
        %740 = vst.msk [vmem:[%s233 + $0x20] sm:$0xff] %vm483, %v678
        %741 = vst.msk [vmem:[%s233 + $0x28] sm:$0xff] %vm483, %v683
        %742 = vst.msk [vmem:[%s233 + $0x30] sm:$0xff] %vm483, %v688
        %743 = vst.msk [vmem:[%s233 + $0x38] sm:$0xff] %vm483, %v693
        %744 = vst.msk [vmem:[%s233 + $0x40] sm:$0xff] %vm483, %v698
        %745 = vst.msk [vmem:[%s233 + $0x48] sm:$0xff] %vm483, %v703
        %746 = vst.msk [vmem:[%s233 + $0x50] sm:$0xff] %vm483, %v708
        %747 = vst.msk [vmem:[%s233 + $0x58] sm:$0xff] %vm483, %v713
        %748 = vst.msk [vmem:[%s233 + $0x60] sm:$0xff] %vm483, %v718
        %749 = vst.msk [vmem:[%s233 + $0x68] sm:$0xff] %vm483, %v723
        %750 = vst.msk [vmem:[%s233 + $0x70] sm:$0xff] %vm483, %v728
        %751 = vst.msk [vmem:[%s233 + $0x78] sm:$0xff] %vm483, %v733
        %752 = vrot.lane.b32.xlu0 %v294, 4
        %v753 = vpop.permute.xlu0 %752
        %754 = vrot.lane.b32.xlu0 %v299, 4
        %v755 = vpop.permute.xlu0 %754
        %756 = vrot.lane.b32.xlu0 %v304, 4
        %v757 = vpop.permute.xlu0 %756
        %758 = vrot.lane.b32.xlu0 %v309, 4
        %v759 = vpop.permute.xlu0 %758
        %760 = vrot.lane.b32.xlu0 %v314, 4
        %v761 = vpop.permute.xlu0 %760
        %762 = vrot.lane.b32.xlu0 %v319, 4
        %v763 = vpop.permute.xlu0 %762
        %764 = vrot.lane.b32.xlu0 %v324, 4
        %v765 = vpop.permute.xlu0 %764
        %766 = vrot.lane.b32.xlu0 %v329, 4
        %v767 = vpop.permute.xlu0 %766
        %776 = vrot.lane.b32.xlu0 %v240, 8
        %v777 = vpop.permute.xlu0 %776
        %778 = vrot.lane.b32.xlu0 %v243, 8
        %v779 = vpop.permute.xlu0 %778
        %780 = vrot.lane.b32.xlu0 %v246, 8
        %v781 = vpop.permute.xlu0 %780
        %782 = vrot.lane.b32.xlu0 %v249, 8
        %v783 = vpop.permute.xlu0 %782
        %784 = vrot.lane.b32.xlu0 %v252, 8
        %v785 = vpop.permute.xlu0 %784
        %786 = vrot.lane.b32.xlu0 %v255, 8
        %v787 = vpop.permute.xlu0 %786
        %788 = vrot.lane.b32.xlu0 %v258, 8
        %v789 = vpop.permute.xlu0 %788
        %790 = vrot.lane.b32.xlu0 %v261, 8
        %v791 = vpop.permute.xlu0 %790
        %800 = vrot.lane.b32.xlu0 %v299, 12
        %v801 = vpop.permute.xlu0 %800
        %802 = vrot.lane.b32.xlu0 %v304, 12
        %v803 = vpop.permute.xlu0 %802
        %804 = vrot.lane.b32.xlu0 %v309, 12
        %v805 = vpop.permute.xlu0 %804
        %806 = vrot.lane.b32.xlu0 %v314, 12
        %v807 = vpop.permute.xlu0 %806
        %808 = vrot.lane.b32.xlu0 %v319, 12
        %v809 = vpop.permute.xlu0 %808
        %810 = vrot.lane.b32.xlu0 %v324, 12
        %v811 = vpop.permute.xlu0 %810
        %812 = vrot.lane.b32.xlu0 %v329, 12
        %v813 = vpop.permute.xlu0 %812
        %814 = vrot.lane.b32.xlu0 %v433, 12
        %v815 = vpop.permute.xlu0 %814
        %v824 = vsel %vm483, %v237, %v753
        %v825 = vsel %vm483, %v240, %v755
        %v826 = vsel %vm483, %v243, %v757
        %v827 = vsel %vm483, %v246, %v759
        %v828 = vsel %vm483, %v249, %v761
        %v829 = vsel %vm483, %v252, %v763
        %v830 = vsel %vm483, %v255, %v765
        %v831 = vsel %vm483, %v258, %v767
        %v832 = vsel %vm500, %v824, %v777
        %v833 = vsel %vm500, %v825, %v779
        %v834 = vsel %vm500, %v826, %v781
        %v835 = vsel %vm500, %v827, %v783
        %v836 = vsel %vm500, %v828, %v785
        %v837 = vsel %vm500, %v829, %v787
        %v838 = vsel %vm500, %v830, %v789
        %v839 = vsel %vm500, %v831, %v791
        %v840 = vsel %vm517, %v832, %v801
        %v841 = vsel %vm517, %v833, %v803
        %v842 = vsel %vm517, %v834, %v805
        %v843 = vsel %vm517, %v835, %v807
        %v844 = vsel %vm517, %v836, %v809
        %v845 = vsel %vm517, %v837, %v811
        %v846 = vsel %vm517, %v838, %v813
        %v847 = vsel %vm517, %v839, %v815
        %v856 = vrot.slane %v518, 1
        %v857 = vrot.slane %v519, 1
        %v858 = vsel %vm290, %v856, %v857
        %v859 = vrot.slane %v840, 1
        %v860 = vsel %vm290, %v857, %v859
        %v861 = vrot.slane %v520, 1
        %v862 = vrot.slane %v521, 1
        %v863 = vsel %vm290, %v861, %v862
        %v864 = vrot.slane %v841, 1
        %v865 = vsel %vm290, %v862, %v864
        %v866 = vrot.slane %v522, 1
        %v867 = vrot.slane %v523, 1
        %v868 = vsel %vm290, %v866, %v867
        %v869 = vrot.slane %v842, 1
        %v870 = vsel %vm290, %v867, %v869
        %v871 = vrot.slane %v524, 1
        %v872 = vrot.slane %v525, 1
        %v873 = vsel %vm290, %v871, %v872
        %v874 = vrot.slane %v843, 1
        %v875 = vsel %vm290, %v872, %v874
        %v876 = vrot.slane %v526, 1
        %v877 = vrot.slane %v527, 1
        %v878 = vsel %vm290, %v876, %v877
        %v879 = vrot.slane %v844, 1
        %v880 = vsel %vm290, %v877, %v879
        %v881 = vrot.slane %v528, 1
        %v882 = vrot.slane %v529, 1
        %v883 = vsel %vm290, %v881, %v882
        %v884 = vrot.slane %v845, 1
        %v885 = vsel %vm290, %v882, %v884
        %v886 = vrot.slane %v530, 1
        %v887 = vrot.slane %v531, 1
        %v888 = vsel %vm290, %v886, %v887
        %v889 = vrot.slane %v846, 1
        %v890 = vsel %vm290, %v887, %v889
        %v891 = vrot.slane %v532, 1
        %v892 = vrot.slane %v533, 1
        %v893 = vsel %vm290, %v891, %v892
        %v894 = vrot.slane %v847, 1
        %v895 = vsel %vm290, %v892, %v894
        %s896 = scalar_lea.vmem [#allocation5], 16
        %v897 = vld [vmem:[%s896] sm:$0xff]
        %v898 = vld [vmem:[%s896 + $0x8] sm:$0xff]
        %v899 = vsel %vm542, %v858, 0
        %v901 = vsel %vm542, %v860, 0
        %v903 = vsel %vm542, %v863, 0
        %v905 = vsel %vm542, %v865, 0
        %v907 = vsel %vm542, %v868, 0
        %v909 = vsel %vm542, %v870, 0
        %v911 = vsel %vm542, %v873, 0
        %v913 = vsel %vm542, %v875, 0
        %v915 = vsel %vm542, %v878, 0
        %v917 = vsel %vm542, %v880, 0
        %v919 = vsel %vm542, %v883, 0
        %v921 = vsel %vm542, %v885, 0
        %v923 = vsel %vm542, %v888, 0
        %v925 = vsel %vm542, %v890, 0
        %v927 = vsel %vm542, %v893, 0
        %v929 = vsel %vm542, %v895, 0
        %931 = vmatprep.subr.mxu0 0.0
        %932 = vmatpush1.msra.mxu0 %v897
        %933 = vmatprep.subr.mxu0 0.0
        %934 = vmatpush1.msra.mxu0 %v898
        %935 = vmatprep.subr.mxu0 0.0
        %936 = vmatpush1.msra.mxu0 0.0
        %937 = vmatprep.subr.mxu0 0.0
        %938 = vmatpush1.msra.mxu0 0.0
        %939 = vmatprep.subr.mxu0 0.0
        %940 = vmatpush1.msra.mxu0 0.0
        %941 = vmatprep.subr.mxu0 0.0
        %942 = vmatpush1.msra.mxu0 0.0
        %943 = vmatprep.subr.mxu0 0.0
        %944 = vmatpush1.msra.mxu0 0.0
        %945 = vmatprep.subr.mxu0 0.0
        %946 = vmatpush1.msra.mxu0 0.0
        %947 = vmatprep.subr.mxu0 0.0
        %948 = vmatpush1.msra.mxu0 0.0
        %949 = vmatprep.subr.mxu0 0.0
        %950 = vmatpush1.msra.mxu0 0.0
        %951 = vmatprep.subr.mxu0 0.0
        %952 = vmatpush1.msra.mxu0 0.0
        %953 = vmatprep.subr.mxu0 0.0
        %954 = vmatpush1.msra.mxu0 0.0
        %955 = vmatprep.subr.mxu0 0.0
        %956 = vmatpush1.msra.mxu0 0.0
        %957 = vmatprep.subr.mxu0 0.0
        %958 = vmatpush1.msra.mxu0 0.0
        %959 = vmatprep.subr.mxu0 0.0
        %960 = vmatpush1.msra.mxu0 0.0
        %961 = vmatprep.subr.mxu0 0.0
        %962 = vmatpush1.msra.mxu0 0.0
        %963 = vmatprep.subr.mxu0 0.0
        %964 = vmatpush1.msra.mxu0 0.0
        %965 = vmatprep.subr.mxu0 0.0
        %966 = vmatpush1.msra.mxu0 0.0
        %967 = vmatprep.subr.mxu0 0.0
        %968 = vmatpush1.msra.mxu0 0.0
        %969 = vmatprep.subr.mxu0 0.0
        %970 = vmatpush1.msra.mxu0 0.0
        %971 = vmatprep.subr.mxu0 0.0
        %972 = vmatpush1.msra.mxu0 0.0
        %973 = vmatprep.subr.mxu0 0.0
        %974 = vmatpush1.msra.mxu0 0.0
        %975 = vmatprep.subr.mxu0 0.0
        %976 = vmatpush1.msra.mxu0 0.0
        %977 = vmatprep.subr.mxu0 0.0
        %978 = vmatpush1.msra.mxu0 0.0
        %979 = vmatprep.subr.mxu0 0.0
        %980 = vmatpush1.msra.mxu0 0.0
        %981 = vmatprep.subr.mxu0 0.0
        %982 = vmatpush1.msra.mxu0 0.0
        %983 = vmatprep.subr.mxu0 0.0
        %984 = vmatpush1.msra.mxu0 0.0
        %985 = vmatprep.subr.mxu0 0.0
        %986 = vmatpush1.msra.mxu0 0.0
        %987 = vmatprep.subr.mxu0 0.0
        %988 = vmatpush1.msra.mxu0 0.0
        %989 = vmatprep.subr.mxu0 0.0
        %990 = vmatpush1.msra.mxu0 0.0
        %991 = vmatprep.subr.mxu0 0.0
        %992 = vmatpush1.msra.mxu0 0.0
        %993 = vmatprep.subr.mxu0 0.0
        %994 = vmatpush1.msra.mxu0 0.0
        %995 = vmatprep.mubr.f32.mxu0 0.0
        %996 = vmatmul.mubr.f32.gmra.mrb[0].mxu0 %v899
        %v997 = vpop.f32.mrb[0].mxu0
        %v998 = vadd.f32 %v540, %v997
        %v999 = vpop.f32.mrb[0].mxu0
        %1000 = vmatprep.mubr.f32.mxu0 0.0
        %1001 = vmatmul.mubr.f32.gmra.mrb[0].mxu0 %v901
        %v1002 = vpop.f32.mrb[0].mxu0
        %v1003 = vadd.f32 %v540, %v1002
        %v1004 = vpop.f32.mrb[0].mxu0
        %1005 = vmatprep.mubr.f32.mxu0 0.0
        %1006 = vmatmul.mubr.f32.gmra.mrb[0].mxu0 %v903
        %v1007 = vpop.f32.mrb[0].mxu0
        %v1008 = vadd.f32 %v540, %v1007
        %v1009 = vpop.f32.mrb[0].mxu0
        %1010 = vmatprep.mubr.f32.mxu0 0.0
        %1011 = vmatmul.mubr.f32.gmra.mrb[0].mxu0 %v905
        %v1012 = vpop.f32.mrb[0].mxu0
        %v1013 = vadd.f32 %v540, %v1012
        %v1014 = vpop.f32.mrb[0].mxu0
        %1015 = vmatprep.mubr.f32.mxu0 0.0
        %1016 = vmatmul.mubr.f32.gmra.mrb[0].mxu0 %v907
        %v1017 = vpop.f32.mrb[0].mxu0
        %v1018 = vadd.f32 %v540, %v1017
        %v1019 = vpop.f32.mrb[0].mxu0
        %1020 = vmatprep.mubr.f32.mxu0 0.0
        %1021 = vmatmul.mubr.f32.gmra.mrb[0].mxu0 %v909
        %v1022 = vpop.f32.mrb[0].mxu0
        %v1023 = vadd.f32 %v540, %v1022
        %v1024 = vpop.f32.mrb[0].mxu0
        %1025 = vmatprep.mubr.f32.mxu0 0.0
        %1026 = vmatmul.mubr.f32.gmra.mrb[0].mxu0 %v911
        %v1027 = vpop.f32.mrb[0].mxu0
        %v1028 = vadd.f32 %v540, %v1027
        %v1029 = vpop.f32.mrb[0].mxu0
        %1030 = vmatprep.mubr.f32.mxu0 0.0
        %1031 = vmatmul.mubr.f32.gmra.mrb[0].mxu0 %v913
        %v1032 = vpop.f32.mrb[0].mxu0
        %v1033 = vadd.f32 %v540, %v1032
        %v1034 = vpop.f32.mrb[0].mxu0
        %1035 = vmatprep.mubr.f32.mxu0 0.0
        %1036 = vmatmul.mubr.f32.gmra.mrb[0].mxu0 %v915
        %v1037 = vpop.f32.mrb[0].mxu0
        %v1038 = vadd.f32 %v540, %v1037
        %v1039 = vpop.f32.mrb[0].mxu0
        %1040 = vmatprep.mubr.f32.mxu0 0.0
        %1041 = vmatmul.mubr.f32.gmra.mrb[0].mxu0 %v917
        %v1042 = vpop.f32.mrb[0].mxu0
        %v1043 = vadd.f32 %v540, %v1042
        %v1044 = vpop.f32.mrb[0].mxu0
        %1045 = vmatprep.mubr.f32.mxu0 0.0
        %1046 = vmatmul.mubr.f32.gmra.mrb[0].mxu0 %v919
        %v1047 = vpop.f32.mrb[0].mxu0
        %v1048 = vadd.f32 %v540, %v1047
        %v1049 = vpop.f32.mrb[0].mxu0
        %1050 = vmatprep.mubr.f32.mxu0 0.0
        %1051 = vmatmul.mubr.f32.gmra.mrb[0].mxu0 %v921
        %v1052 = vpop.f32.mrb[0].mxu0
        %v1053 = vadd.f32 %v540, %v1052
        %v1054 = vpop.f32.mrb[0].mxu0
        %1055 = vmatprep.mubr.f32.mxu0 0.0
        %1056 = vmatmul.mubr.f32.gmra.mrb[0].mxu0 %v923
        %v1057 = vpop.f32.mrb[0].mxu0
        %v1058 = vadd.f32 %v540, %v1057
        %v1059 = vpop.f32.mrb[0].mxu0
        %1060 = vmatprep.mubr.f32.mxu0 0.0
        %1061 = vmatmul.mubr.f32.gmra.mrb[0].mxu0 %v925
        %v1062 = vpop.f32.mrb[0].mxu0
        %v1063 = vadd.f32 %v540, %v1062
        %v1064 = vpop.f32.mrb[0].mxu0
        %1065 = vmatprep.mubr.f32.mxu0 0.0
        %1066 = vmatmul.mubr.f32.gmra.mrb[0].mxu0 %v927
        %v1067 = vpop.f32.mrb[0].mxu0
        %v1068 = vadd.f32 %v540, %v1067
        %v1069 = vpop.f32.mrb[0].mxu0
        %1070 = vmatprep.mubr.f32.mxu0 0.0
        %1071 = vmatmul.mubr.f32.gmra.mrb[0].mxu0 %v929
        %v1072 = vpop.f32.mrb[0].mxu0
        %v1073 = vadd.f32 %v540, %v1072
        %v1074 = vpop.f32.mrb[0].mxu0
        %1075 = vdwg.mxu0
        %s1076 = scalar_lea.vmem %s233, 128 [#allocation8]
        %1077 = vst.msk [vmem:[%s1076] sm:$0xff] %vm483, %v998
        %1078 = vst.msk [vmem:[%s1076 + $0x8] sm:$0xff] %vm483, %v1003
        %1079 = vst.msk [vmem:[%s1076 + $0x10] sm:$0xff] %vm483, %v1008
        %1080 = vst.msk [vmem:[%s1076 + $0x18] sm:$0xff] %vm483, %v1013
        %1081 = vst.msk [vmem:[%s1076 + $0x20] sm:$0xff] %vm483, %v1018
        %1082 = vst.msk [vmem:[%s1076 + $0x28] sm:$0xff] %vm483, %v1023
        %1083 = vst.msk [vmem:[%s1076 + $0x30] sm:$0xff] %vm483, %v1028
        %1084 = vst.msk [vmem:[%s1076 + $0x38] sm:$0xff] %vm483, %v1033
        %1085 = vst.msk [vmem:[%s1076 + $0x40] sm:$0xff] %vm483, %v1038
        %1086 = vst.msk [vmem:[%s1076 + $0x48] sm:$0xff] %vm483, %v1043
        %1087 = vst.msk [vmem:[%s1076 + $0x50] sm:$0xff] %vm483, %v1048
        %1088 = vst.msk [vmem:[%s1076 + $0x58] sm:$0xff] %vm483, %v1053
        %1089 = vst.msk [vmem:[%s1076 + $0x60] sm:$0xff] %vm483, %v1058
        %1090 = vst.msk [vmem:[%s1076 + $0x68] sm:$0xff] %vm483, %v1063
        %1091 = vst.msk [vmem:[%s1076 + $0x70] sm:$0xff] %vm483, %v1068
        %1092 = vst.msk [vmem:[%s1076 + $0x78] sm:$0xff] %vm483, %v1073
        %1093 = vrot.lane.b32.xlu0 %v432, 4
        %v1094 = vpop.permute.xlu0 %1093
        %1095 = vrot.lane.b32.xlu0 %v434, 4
        %v1096 = vpop.permute.xlu0 %1095
        %1101 = vrot.lane.b32.xlu0 %v262, 8
        %v1102 = vpop.permute.xlu0 %1101
        %1103 = vrot.lane.b32.xlu0 %v263, 8
        %v1104 = vpop.permute.xlu0 %1103
        %v1108 = vrot.slane %v262, 1
        %v1109 = vrot.slane %v263, 1
        %v1110 = vsel %vm290, %v1108, %v1109
        %v1111 = vrot.slane %v264, 1
        %v1112 = vsel %vm290, %v1109, %v1111
        %1113 = vrot.lane.b32.xlu0 %v1110, 12
        %v1114 = vpop.permute.xlu0 %1113
        %1115 = vrot.lane.b32.xlu0 %v1112, 12
        %v1116 = vpop.permute.xlu0 %1115
        %v1119 = vsel %vm483, %v259, %v1094
        %v1120 = vsel %vm483, %v260, %v1096
        %v1121 = vsel %vm500, %v1119, %v1102
        %v1122 = vsel %vm500, %v1120, %v1104
        %v1123 = vsel %vm517, %v1121, %v1114
        %v1124 = vsel %vm517, %v1122, %v1116
        %s1125 = scalar_lea.vmem [#allocation5], 32
        %v1126 = vld [vmem:[%s1125] sm:$0xff]
        %v1127 = vld [vmem:[%s1125 + $0x8] sm:$0xff]
        %v1129 = vsel %vm542, %v1123, 0
        %v1132 = vsel %vm542, %v1124, 0
        %1134 = vmatprep.subr.mxu0 0.0
        %1135 = vmatpush1.msra.mxu0 %v1126
        %1136 = vmatprep.subr.mxu0 0.0
        %1137 = vmatpush1.msra.mxu0 %v1127
        %1138 = vmatprep.subr.mxu0 0.0
        %1139 = vmatpush1.msra.mxu0 0.0
        %1140 = vmatprep.subr.mxu0 0.0
        %1141 = vmatpush1.msra.mxu0 0.0
        %1142 = vmatprep.subr.mxu0 0.0
        %1143 = vmatpush1.msra.mxu0 0.0
        %1144 = vmatprep.subr.mxu0 0.0
        %1145 = vmatpush1.msra.mxu0 0.0
        %1146 = vmatprep.subr.mxu0 0.0
        %1147 = vmatpush1.msra.mxu0 0.0
        %1148 = vmatprep.subr.mxu0 0.0
        %1149 = vmatpush1.msra.mxu0 0.0
        %1150 = vmatprep.subr.mxu0 0.0
        %1151 = vmatpush1.msra.mxu0 0.0
        %1152 = vmatprep.subr.mxu0 0.0
        %1153 = vmatpush1.msra.mxu0 0.0
        %1154 = vmatprep.subr.mxu0 0.0
        %1155 = vmatpush1.msra.mxu0 0.0
        %1156 = vmatprep.subr.mxu0 0.0
        %1157 = vmatpush1.msra.mxu0 0.0
        %1158 = vmatprep.subr.mxu0 0.0
        %1159 = vmatpush1.msra.mxu0 0.0
        %1160 = vmatprep.subr.mxu0 0.0
        %1161 = vmatpush1.msra.mxu0 0.0
        %1162 = vmatprep.subr.mxu0 0.0
        %1163 = vmatpush1.msra.mxu0 0.0
        %1164 = vmatprep.subr.mxu0 0.0
        %1165 = vmatpush1.msra.mxu0 0.0
        %1166 = vmatprep.subr.mxu0 0.0
        %1167 = vmatpush1.msra.mxu0 0.0
        %1168 = vmatprep.subr.mxu0 0.0
        %1169 = vmatpush1.msra.mxu0 0.0
        %1170 = vmatprep.subr.mxu0 0.0
        %1171 = vmatpush1.msra.mxu0 0.0
        %1172 = vmatprep.subr.mxu0 0.0
        %1173 = vmatpush1.msra.mxu0 0.0
        %1174 = vmatprep.subr.mxu0 0.0
        %1175 = vmatpush1.msra.mxu0 0.0
        %1176 = vmatprep.subr.mxu0 0.0
        %1177 = vmatpush1.msra.mxu0 0.0
        %1178 = vmatprep.subr.mxu0 0.0
        %1179 = vmatpush1.msra.mxu0 0.0
        %1180 = vmatprep.subr.mxu0 0.0
        %1181 = vmatpush1.msra.mxu0 0.0
        %1182 = vmatprep.subr.mxu0 0.0
        %1183 = vmatpush1.msra.mxu0 0.0
        %1184 = vmatprep.subr.mxu0 0.0
        %1185 = vmatpush1.msra.mxu0 0.0
        %1186 = vmatprep.subr.mxu0 0.0
        %1187 = vmatpush1.msra.mxu0 0.0
        %1188 = vmatprep.subr.mxu0 0.0
        %1189 = vmatpush1.msra.mxu0 0.0
        %1190 = vmatprep.subr.mxu0 0.0
        %1191 = vmatpush1.msra.mxu0 0.0
        %1192 = vmatprep.subr.mxu0 0.0
        %1193 = vmatpush1.msra.mxu0 0.0
        %1194 = vmatprep.subr.mxu0 0.0
        %1195 = vmatpush1.msra.mxu0 0.0
        %1196 = vmatprep.subr.mxu0 0.0
        %1197 = vmatpush1.msra.mxu0 0.0
        %1198 = vmatprep.mubr.f32.mxu0 0.0
        %1199 = vmatmul.mubr.f32.gmra.mrb[0].mxu0 %v550
        %v1200 = vpop.f32.mrb[0].mxu0
        %v1201 = vadd.f32 %v540, %v1200
        %v1202 = vpop.f32.mrb[0].mxu0
        %1203 = vmatprep.mubr.f32.mxu0 0.0
        %1204 = vmatmul.mubr.f32.gmra.mrb[0].mxu0 %v553
        %v1205 = vpop.f32.mrb[0].mxu0
        %v1206 = vadd.f32 %v540, %v1205
        %v1207 = vpop.f32.mrb[0].mxu0
        %1208 = vmatprep.mubr.f32.mxu0 0.0
        %1209 = vmatmul.mubr.f32.gmra.mrb[0].mxu0 %v556
        %v1210 = vpop.f32.mrb[0].mxu0
        %v1211 = vadd.f32 %v540, %v1210
        %v1212 = vpop.f32.mrb[0].mxu0
        %1213 = vmatprep.mubr.f32.mxu0 0.0
        %1214 = vmatmul.mubr.f32.gmra.mrb[0].mxu0 %v559
        %v1215 = vpop.f32.mrb[0].mxu0
        %v1216 = vadd.f32 %v540, %v1215
        %v1217 = vpop.f32.mrb[0].mxu0
        %1218 = vmatprep.mubr.f32.mxu0 0.0
        %1219 = vmatmul.mubr.f32.gmra.mrb[0].mxu0 %v562
        %v1220 = vpop.f32.mrb[0].mxu0
        %v1221 = vadd.f32 %v540, %v1220
        %v1222 = vpop.f32.mrb[0].mxu0
        %1223 = vmatprep.mubr.f32.mxu0 0.0
        %1224 = vmatmul.mubr.f32.gmra.mrb[0].mxu0 %v565
        %v1225 = vpop.f32.mrb[0].mxu0
        %v1226 = vadd.f32 %v540, %v1225
        %v1227 = vpop.f32.mrb[0].mxu0
        %1228 = vmatprep.mubr.f32.mxu0 0.0
        %1229 = vmatmul.mubr.f32.gmra.mrb[0].mxu0 %v568
        %v1230 = vpop.f32.mrb[0].mxu0
        %v1231 = vadd.f32 %v540, %v1230
        %v1232 = vpop.f32.mrb[0].mxu0
        %1233 = vmatprep.mubr.f32.mxu0 0.0
        %1234 = vmatmul.mubr.f32.gmra.mrb[0].mxu0 %v571
        %v1235 = vpop.f32.mrb[0].mxu0
        %v1236 = vadd.f32 %v540, %v1235
        %v1237 = vpop.f32.mrb[0].mxu0
        %1238 = vmatprep.mubr.f32.mxu0 0.0
        %1239 = vmatmul.mubr.f32.gmra.mrb[0].mxu0 %v574
        %v1240 = vpop.f32.mrb[0].mxu0
        %v1241 = vadd.f32 %v540, %v1240
        %v1242 = vpop.f32.mrb[0].mxu0
        %1243 = vmatprep.mubr.f32.mxu0 0.0
        %1244 = vmatmul.mubr.f32.gmra.mrb[0].mxu0 %v577
        %v1245 = vpop.f32.mrb[0].mxu0
        %v1246 = vadd.f32 %v540, %v1245
        %v1247 = vpop.f32.mrb[0].mxu0
        %1248 = vmatprep.mubr.f32.mxu0 0.0
        %1249 = vmatmul.mubr.f32.gmra.mrb[0].mxu0 %v580
        %v1250 = vpop.f32.mrb[0].mxu0
        %v1251 = vadd.f32 %v540, %v1250
        %v1252 = vpop.f32.mrb[0].mxu0
        %1253 = vmatprep.mubr.f32.mxu0 0.0
        %1254 = vmatmul.mubr.f32.gmra.mrb[0].mxu0 %v583
        %v1255 = vpop.f32.mrb[0].mxu0
        %v1256 = vadd.f32 %v540, %v1255
        %v1257 = vpop.f32.mrb[0].mxu0
        %1258 = vmatprep.mubr.f32.mxu0 0.0
        %1259 = vmatmul.mubr.f32.gmra.mrb[0].mxu0 %v586
        %v1260 = vpop.f32.mrb[0].mxu0
        %v1261 = vadd.f32 %v540, %v1260
        %v1262 = vpop.f32.mrb[0].mxu0
        %1263 = vmatprep.mubr.f32.mxu0 0.0
        %1264 = vmatmul.mubr.f32.gmra.mrb[0].mxu0 %v589
        %v1265 = vpop.f32.mrb[0].mxu0
        %v1266 = vadd.f32 %v540, %v1265
        %v1267 = vpop.f32.mrb[0].mxu0
        %1268 = vmatprep.mubr.f32.mxu0 0.0
        %1269 = vmatmul.mubr.f32.gmra.mrb[0].mxu0 %v1129
        %v1270 = vpop.f32.mrb[0].mxu0
        %v1271 = vadd.f32 %v540, %v1270
        %v1272 = vpop.f32.mrb[0].mxu0
        %1273 = vmatprep.mubr.f32.mxu0 0.0
        %1274 = vmatmul.mubr.f32.gmra.mrb[0].mxu0 %v1132
        %v1275 = vpop.f32.mrb[0].mxu0
        %v1276 = vadd.f32 %v540, %v1275
        %v1277 = vpop.f32.mrb[0].mxu0
        %1278 = vdwg.mxu0
        %s1279 = scalar_lea.vmem %s233, 256 [#allocation8]
        %1280 = vst.msk [vmem:[%s1279] sm:$0xff] %vm483, %v1201
        %1281 = vst.msk [vmem:[%s1279 + $0x8] sm:$0xff] %vm483, %v1206
        %1282 = vst.msk [vmem:[%s1279 + $0x10] sm:$0xff] %vm483, %v1211
        %1283 = vst.msk [vmem:[%s1279 + $0x18] sm:$0xff] %vm483, %v1216
        %1284 = vst.msk [vmem:[%s1279 + $0x20] sm:$0xff] %vm483, %v1221
        %1285 = vst.msk [vmem:[%s1279 + $0x28] sm:$0xff] %vm483, %v1226
        %1286 = vst.msk [vmem:[%s1279 + $0x30] sm:$0xff] %vm483, %v1231
        %1287 = vst.msk [vmem:[%s1279 + $0x38] sm:$0xff] %vm483, %v1236
        %1288 = vst.msk [vmem:[%s1279 + $0x40] sm:$0xff] %vm483, %v1241
        %1289 = vst.msk [vmem:[%s1279 + $0x48] sm:$0xff] %vm483, %v1246
        %1290 = vst.msk [vmem:[%s1279 + $0x50] sm:$0xff] %vm483, %v1251
        %1291 = vst.msk [vmem:[%s1279 + $0x58] sm:$0xff] %vm483, %v1256
        %1292 = vst.msk [vmem:[%s1279 + $0x60] sm:$0xff] %vm483, %v1261
        %1293 = vst.msk [vmem:[%s1279 + $0x68] sm:$0xff] %vm483, %v1266
        %1294 = vst.msk [vmem:[%s1279 + $0x70] sm:$0xff] %vm483, %v1271
        %1295 = vst.msk [vmem:[%s1279 + $0x78] sm:$0xff] %vm483, %v1276
        %1296 = vrot.lane.b32.xlu0 %v433, 4
        %v1297 = vpop.permute.xlu0 %1296
        %1299 = vrot.lane.b32.xlu0 %v264, 8
        %v1300 = vpop.permute.xlu0 %1299
        %1302 = vrot.lane.b32.xlu0 %v1111, 12
        %v1303 = vpop.permute.xlu0 %1302
        %v1305 = vsel %vm483, %v261, %v1297
        %v1306 = vsel %vm500, %v1305, %v1300
        %v1307 = vsel %vm517, %v1306, %v1303
        %v1309 = vrot.slane %v1123, 1
        %v1310 = vrot.slane %v1124, 1
        %v1311 = vsel %vm290, %v1309, %v1310
        %v1312 = vrot.slane %v1307, 1
        %v1313 = vsel %vm290, %v1310, %v1312
        %s1314 = scalar_lea.vmem [#allocation5], 48
        %v1315 = vld [vmem:[%s1314] sm:$0xff]
        %v1316 = vld [vmem:[%s1314 + $0x8] sm:$0xff]
        %v1317 = vsel %vm542, %v1311, 0
        %v1319 = vsel %vm542, %v1313, 0
        %1321 = vmatprep.subr.mxu0 0.0
        %1322 = vmatpush1.msra.mxu0 %v1315
        %1323 = vmatprep.subr.mxu0 0.0
        %1324 = vmatpush1.msra.mxu0 %v1316
        %1325 = vmatprep.subr.mxu0 0.0
        %1326 = vmatpush1.msra.mxu0 0.0
        %1327 = vmatprep.subr.mxu0 0.0
        %1328 = vmatpush1.msra.mxu0 0.0
        %1329 = vmatprep.subr.mxu0 0.0
        %1330 = vmatpush1.msra.mxu0 0.0
        %1331 = vmatprep.subr.mxu0 0.0
        %1332 = vmatpush1.msra.mxu0 0.0
        %1333 = vmatprep.subr.mxu0 0.0
        %1334 = vmatpush1.msra.mxu0 0.0
        %1335 = vmatprep.subr.mxu0 0.0
        %1336 = vmatpush1.msra.mxu0 0.0
        %1337 = vmatprep.subr.mxu0 0.0
        %1338 = vmatpush1.msra.mxu0 0.0
        %1339 = vmatprep.subr.mxu0 0.0
        %1340 = vmatpush1.msra.mxu0 0.0
        %1341 = vmatprep.subr.mxu0 0.0
        %1342 = vmatpush1.msra.mxu0 0.0
        %1343 = vmatprep.subr.mxu0 0.0
        %1344 = vmatpush1.msra.mxu0 0.0
        %1345 = vmatprep.subr.mxu0 0.0
        %1346 = vmatpush1.msra.mxu0 0.0
        %1347 = vmatprep.subr.mxu0 0.0
        %1348 = vmatpush1.msra.mxu0 0.0
        %1349 = vmatprep.subr.mxu0 0.0
        %1350 = vmatpush1.msra.mxu0 0.0
        %1351 = vmatprep.subr.mxu0 0.0
        %1352 = vmatpush1.msra.mxu0 0.0
        %1353 = vmatprep.subr.mxu0 0.0
        %1354 = vmatpush1.msra.mxu0 0.0
        %1355 = vmatprep.subr.mxu0 0.0
        %1356 = vmatpush1.msra.mxu0 0.0
        %1357 = vmatprep.subr.mxu0 0.0
        %1358 = vmatpush1.msra.mxu0 0.0
        %1359 = vmatprep.subr.mxu0 0.0
        %1360 = vmatpush1.msra.mxu0 0.0
        %1361 = vmatprep.subr.mxu0 0.0
        %1362 = vmatpush1.msra.mxu0 0.0
        %1363 = vmatprep.subr.mxu0 0.0
        %1364 = vmatpush1.msra.mxu0 0.0
        %1365 = vmatprep.subr.mxu0 0.0
        %1366 = vmatpush1.msra.mxu0 0.0
        %1367 = vmatprep.subr.mxu0 0.0
        %1368 = vmatpush1.msra.mxu0 0.0
        %1369 = vmatprep.subr.mxu0 0.0
        %1370 = vmatpush1.msra.mxu0 0.0
        %1371 = vmatprep.subr.mxu0 0.0
        %1372 = vmatpush1.msra.mxu0 0.0
        %1373 = vmatprep.subr.mxu0 0.0
        %1374 = vmatpush1.msra.mxu0 0.0
        %1375 = vmatprep.subr.mxu0 0.0
        %1376 = vmatpush1.msra.mxu0 0.0
        %1377 = vmatprep.subr.mxu0 0.0
        %1378 = vmatpush1.msra.mxu0 0.0
        %1379 = vmatprep.subr.mxu0 0.0
        %1380 = vmatpush1.msra.mxu0 0.0
        %1381 = vmatprep.subr.mxu0 0.0
        %1382 = vmatpush1.msra.mxu0 0.0
        %1383 = vmatprep.subr.mxu0 0.0
        %1384 = vmatpush1.msra.mxu0 0.0
        %1385 = vmatprep.mubr.f32.mxu0 0.0
        %1386 = vmatmul.mubr.f32.gmra.mrb[0].mxu0 %v903
        %v1387 = vpop.f32.mrb[0].mxu0
        %v1388 = vadd.f32 %v540, %v1387
        %v1389 = vpop.f32.mrb[0].mxu0
        %1390 = vmatprep.mubr.f32.mxu0 0.0
        %1391 = vmatmul.mubr.f32.gmra.mrb[0].mxu0 %v905
        %v1392 = vpop.f32.mrb[0].mxu0
        %v1393 = vadd.f32 %v540, %v1392
        %v1394 = vpop.f32.mrb[0].mxu0
        %1395 = vmatprep.mubr.f32.mxu0 0.0
        %1396 = vmatmul.mubr.f32.gmra.mrb[0].mxu0 %v907
        %v1397 = vpop.f32.mrb[0].mxu0
        %v1398 = vadd.f32 %v540, %v1397
        %v1399 = vpop.f32.mrb[0].mxu0
        %1400 = vmatprep.mubr.f32.mxu0 0.0
        %1401 = vmatmul.mubr.f32.gmra.mrb[0].mxu0 %v909
        %v1402 = vpop.f32.mrb[0].mxu0
        %v1403 = vadd.f32 %v540, %v1402
        %v1404 = vpop.f32.mrb[0].mxu0
        %1405 = vmatprep.mubr.f32.mxu0 0.0
        %1406 = vmatmul.mubr.f32.gmra.mrb[0].mxu0 %v911
        %v1407 = vpop.f32.mrb[0].mxu0
        %v1408 = vadd.f32 %v540, %v1407
        %v1409 = vpop.f32.mrb[0].mxu0
        %1410 = vmatprep.mubr.f32.mxu0 0.0
        %1411 = vmatmul.mubr.f32.gmra.mrb[0].mxu0 %v913
        %v1412 = vpop.f32.mrb[0].mxu0
        %v1413 = vadd.f32 %v540, %v1412
        %v1414 = vpop.f32.mrb[0].mxu0
        %1415 = vmatprep.mubr.f32.mxu0 0.0
        %1416 = vmatmul.mubr.f32.gmra.mrb[0].mxu0 %v915
        %v1417 = vpop.f32.mrb[0].mxu0
        %v1418 = vadd.f32 %v540, %v1417
        %v1419 = vpop.f32.mrb[0].mxu0
        %1420 = vmatprep.mubr.f32.mxu0 0.0
        %1421 = vmatmul.mubr.f32.gmra.mrb[0].mxu0 %v917
        %v1422 = vpop.f32.mrb[0].mxu0
        %v1423 = vadd.f32 %v540, %v1422
        %v1424 = vpop.f32.mrb[0].mxu0
        %1425 = vmatprep.mubr.f32.mxu0 0.0
        %1426 = vmatmul.mubr.f32.gmra.mrb[0].mxu0 %v919
        %v1427 = vpop.f32.mrb[0].mxu0
        %v1428 = vadd.f32 %v540, %v1427
        %v1429 = vpop.f32.mrb[0].mxu0
        %1430 = vmatprep.mubr.f32.mxu0 0.0
        %1431 = vmatmul.mubr.f32.gmra.mrb[0].mxu0 %v921
        %v1432 = vpop.f32.mrb[0].mxu0
        %v1433 = vadd.f32 %v540, %v1432
        %v1434 = vpop.f32.mrb[0].mxu0
        %1435 = vmatprep.mubr.f32.mxu0 0.0
        %1436 = vmatmul.mubr.f32.gmra.mrb[0].mxu0 %v923
        %v1437 = vpop.f32.mrb[0].mxu0
        %v1438 = vadd.f32 %v540, %v1437
        %v1439 = vpop.f32.mrb[0].mxu0
        %1440 = vmatprep.mubr.f32.mxu0 0.0
        %1441 = vmatmul.mubr.f32.gmra.mrb[0].mxu0 %v925
        %v1442 = vpop.f32.mrb[0].mxu0
        %v1443 = vadd.f32 %v540, %v1442
        %v1444 = vpop.f32.mrb[0].mxu0
        %1445 = vmatprep.mubr.f32.mxu0 0.0
        %1446 = vmatmul.mubr.f32.gmra.mrb[0].mxu0 %v927
        %v1447 = vpop.f32.mrb[0].mxu0
        %v1448 = vadd.f32 %v540, %v1447
        %v1449 = vpop.f32.mrb[0].mxu0
        %1450 = vmatprep.mubr.f32.mxu0 0.0
        %1451 = vmatmul.mubr.f32.gmra.mrb[0].mxu0 %v929
        %v1452 = vpop.f32.mrb[0].mxu0
        %v1453 = vadd.f32 %v540, %v1452
        %v1454 = vpop.f32.mrb[0].mxu0
        %1455 = vmatprep.mubr.f32.mxu0 0.0
        %1456 = vmatmul.mubr.f32.gmra.mrb[0].mxu0 %v1317
        %v1457 = vpop.f32.mrb[0].mxu0
        %v1458 = vadd.f32 %v540, %v1457
        %v1459 = vpop.f32.mrb[0].mxu0
        %1460 = vmatprep.mubr.f32.mxu0 0.0
        %1461 = vmatmul.mubr.f32.gmra.mrb[0].mxu0 %v1319
        %v1462 = vpop.f32.mrb[0].mxu0
        %v1463 = vadd.f32 %v540, %v1462
        %v1464 = vpop.f32.mrb[0].mxu0
        %1465 = vdwg.mxu0
        %s1466 = scalar_lea.vmem %s233, 384 [#allocation8]
        %1467 = vst.msk [vmem:[%s1466] sm:$0xff] %vm483, %v1388
        %1468 = vst.msk [vmem:[%s1466 + $0x8] sm:$0xff] %vm483, %v1393
        %1469 = vst.msk [vmem:[%s1466 + $0x10] sm:$0xff] %vm483, %v1398
        %1470 = vst.msk [vmem:[%s1466 + $0x18] sm:$0xff] %vm483, %v1403
        %1471 = vst.msk [vmem:[%s1466 + $0x20] sm:$0xff] %vm483, %v1408
        %1472 = vst.msk [vmem:[%s1466 + $0x28] sm:$0xff] %vm483, %v1413
        %1473 = vst.msk [vmem:[%s1466 + $0x30] sm:$0xff] %vm483, %v1418
        %1474 = vst.msk [vmem:[%s1466 + $0x38] sm:$0xff] %vm483, %v1423
        %1475 = vst.msk [vmem:[%s1466 + $0x40] sm:$0xff] %vm483, %v1428
        %1476 = vst.msk [vmem:[%s1466 + $0x48] sm:$0xff] %vm483, %v1433
        %1477 = vst.msk [vmem:[%s1466 + $0x50] sm:$0xff] %vm483, %v1438
        %1478 = vst.msk [vmem:[%s1466 + $0x58] sm:$0xff] %vm483, %v1443
        %1479 = vst.msk [vmem:[%s1466 + $0x60] sm:$0xff] %vm483, %v1448
        %1480 = vst.msk [vmem:[%s1466 + $0x68] sm:$0xff] %vm483, %v1453
        %1481 = vst.msk [vmem:[%s1466 + $0x70] sm:$0xff] %vm483, %v1458
        %1482 = vst.msk [vmem:[%s1466 + $0x78] sm:$0xff] %vm483, %v1463
        %s1483 = sand.u32 %s113, 1
        %s1484 = scalar_lea.sflag [#allocation4], %s1483
        %s1485 = sand.u32 %s113, 1
        %s1486 = smul.addr %s1485, 512
        %s1487 = scalar_lea.vmem [#allocation8], %s1486
        // Predicated region
        $region45: #{upsample_forward.1} parent=31 // pred_check
          %p1488 = pneg %p123
        $region46: #{upsample_forward.1} parent=31 // pred_check_branch
          %1490 = sbr.rel (%p1488) target = $region48
        $region47: #{upsample_forward.1} parent=31 // pred_region
          #allocation10 [shape = 'u32[6]{0}', space=smem, size = 0x18, scoped, tag = 'DMA stride descriptor']
          %s1491 = smul.u32 8, %s26
          %s1493 = ssub.s32 8192, 8192
          %1494 = vsyncadd %s1484, %s1493
          %s1495 = smul.addr %s1491, 2
          %s1496 = smul.addr %s25, 128
          %s1497 = sadd.s32 %s1495, %s1496
          %s1498 = smul.addr %s1497, 128
          %s1499 = scalar_lea.hbm %s3, %s1498
          %s1501 = sshll.u32 1, 14
          %s1502 = sxor.u32 4294967295, %s1501
          %s1505 = sshll.u32 7, 18
          %s1506 = sxor.u32 4294967295, %s1505
          %s1507 = sand.u32 0, %s1506
          %s1509 = sor.u32 %s1507, 0
          %s1511 = sshll.u32 3, 24
          %s1512 = sxor.u32 4294967295, %s1511
          %s1513 = sand.u32 %s1509, %s1512
          %s1515 = sor.u32 %s1513, 0
          %s1516 = sshll.u32 %s1487, 4
          %s1517 = int_to_ptr.vmem [resolvable:$true] %s1516
          %1523 = sst [smem:[#allocation10]] 2048
          %s1524 = scalar_lea.smem [#allocation10], 1
          %1525 = sst [smem:[%s1524]] 4096
          %s1526 = scalar_lea.smem [#allocation10], 2
          %1527 = sst [smem:[%s1526]] 16
          %s1528 = scalar_lea.smem [#allocation10], 3
          %1529 = sst [smem:[%s1528]] 128
          %s1530 = scalar_lea.smem [#allocation10], 4
          %1531 = sst [smem:[%s1530]] 128
          %s1532 = scalar_lea.smem [#allocation10], 5
          %1533 = sst [smem:[%s1532]] 8
          %1535 = dma.general %s1517, 8192, %s1499, %s1484, [#allocation9], [#allocation10], %s1515, 0
        $region48: #{upsample_forward.1} parent=31 // pred_fallthru
          _
      $region32: #{upsample_forward.1} parent=5 // pred_fallthru
        _
      %p1536 = scmp.le.s32.totalorder 2, %s16
      // Predicated region
      $region49: #{upsample_forward.1} parent=5 // pred_check
        %p1537 = pneg %p1536
      $region50: #{upsample_forward.1} parent=5 // pred_check_branch
        %1539 = sbr.rel (%p1537) target = $region52
      $region51: #{upsample_forward.1} parent=5 // pred_region
        %s1540 = ssub.s32 %s16, 2
        // Predicated region
        $region53: #{upsample_forward.1} parent=51 // pred_check
          %p1541 = pneg %p129
        $region54: #{upsample_forward.1} parent=51 // pred_check_branch
          %1543 = sbr.rel (%p1541) target = $region56
        $region55: #{upsample_forward.1} parent=51 // pred_region
          %s1544 = sand.u32 %s114, 1
          %s1545 = scalar_lea.sflag [#allocation4], %s1544
          %s1546 = sand.u32 %s114, 1
          %s1547 = smul.addr %s1546, 512
          %s1548 = scalar_lea.vmem [#allocation8], %s1547
          %1549 = dma.done %s1545, 8192
        $region56: #{upsample_forward.1} parent=51 // pred_fallthru
          _
      $region52: #{upsample_forward.1} parent=5 // pred_fallthru
        _
    $region6: #{upsample_forward.1} parent=1 // loop_footer
      %s20 = sadd.s32 1, %s16
    $region7: #{upsample_forward.1} parent=1 // loop_footer_branch
      %15 = sbr.rel target = $region3
    $region8: #{upsample_forward.1} parent=1 // loop_exit
      _
    %1550 = vsyncpa [#allocation3], 1
    %s1551 = scalar_lea.sflag [#allocation3], 1
    %1552 = vsyncpa %s1551, 1
    %1553 = vsyncpa [#allocation6], 1
    %1554 = vsyncpa [#allocation4], 1
    %s1555 = scalar_lea.sflag [#allocation4], 1
    %1556 = vsyncpa %s1555, 1

</llo_original>
